<compile_context>
chip_gen: v5e
topology: v5e:2x2
jax: 0.10.0
libtpu: 0.0.40
codegen_flags: <defaults>
</compile_context>

<pallas_src>
import functools

import jax
import jax.numpy as jnp
from jax.experimental import pallas as pl
from jax.experimental.pallas import tpu as pltpu

MASK_BIAS = -1e30   # score assigned to non-edges
M_FLOOR = -1e20     # init for the running max so exp(MASK_BIAS - m) underflows to exactly
                    # 0 even for fully-masked (isolated / padded) target rows

_VMEM = pl.BlockSpec(memory_space=pltpu.MemorySpace.VMEM)


# ---------------------------------------------------------------------------
# Kernel 1: fused Q|K|V|skip projection.  One lane-dense MXU matmul per row tile;
# q/k/v are written out already in [H, N, C] layout, skip in [N, H*C].
# ---------------------------------------------------------------------------
def _fused_proj_kernel(x_ref, w_ref, b_ref, q_ref, k_ref, v_ref, skip_ref, *, heads, ch):
    acc = jnp.dot(x_ref[...], w_ref[...], preferred_element_type=jnp.float32)
    acc = (acc + b_ref[...].astype(jnp.float32)).astype(q_ref.dtype)   # [rows, 4*H*C]
    hc = heads * ch
    # Static 4-way head unroll only in this epilogue (outside the attention hot loop):
    # each write is a [rows, C] slab into head h of the [H, rows, C] output tile.
    for h in range(heads):
        q_ref[h] = acc[:, h * ch:(h + 1) * ch]
        k_ref[h] = acc[:, hc + h * ch: hc + (h + 1) * ch]
        v_ref[h] = acc[:, 2 * hc + h * ch: 2 * hc + (h + 1) * ch]
    skip_ref[...] = acc[:, 3 * hc:4 * hc]


def fused_projection(x, w, b, *, heads, ch, block_rows):
    n, f_in = x.shape
    hc = heads * ch
    out_dim = 4 * hc
    cost = pl.CostEstimate(
        flops=2 * n * f_in * out_dim,
        transcendentals=0,
        bytes_accessed=2 * (n * f_in + f_in * out_dim + n * out_dim),
    )
    kernel = functools.partial(_fused_proj_kernel, heads=heads, ch=ch)
    hnc_shape = jax.ShapeDtypeStruct((heads, n, ch), jnp.bfloat16)
    hnc_spec = pl.BlockSpec((heads, block_rows, ch), lambda i: (0, i, 0))
    return pl.pallas_call(
        kernel,
        out_shape=(hnc_shape, hnc_shape, hnc_shape,
                   jax.ShapeDtypeStruct((n, hc), jnp.bfloat16)),
        grid_spec=pltpu.PrefetchScalarGridSpec(
            num_scalar_prefetch=0,
            grid=(n // block_rows,),
            in_specs=[
                pl.BlockSpec((block_rows, f_in), lambda i: (i, 0)),
                pl.BlockSpec((f_in, out_dim), lambda i: (0, 0)),
                pl.BlockSpec((1, out_dim), lambda i: (0, 0)),
            ],
            out_specs=(
                hnc_spec,
                pl.BlockSpec((heads, block_rows, ch), lambda i: (0, i, 0)),
                pl.BlockSpec((heads, block_rows, ch), lambda i: (0, i, 0)),
                pl.BlockSpec((block_rows, hc), lambda i: (i, 0)),
            ),
        ),
        compiler_params=pltpu.CompilerParams(
            dimension_semantics=("parallel",),
            vmem_limit_bytes=32 * 1024 * 1024),
        cost_estimate=cost,
    )(x, w, b)


# ---------------------------------------------------------------------------
# Kernel 2: block-sparse masked multi-head attention (online softmax) + skip + ReLU.
#   q/k/v: [H, N, C] bf16 (K/V resident in VMEM), mask: [N, N] int8 (0/1),
#   skip: [N, H*C] bf16.  Scalar prefetch: per-q-tile occupied-block counts and the
#   flat table of occupied kv-block indices (padded by repeating the last valid block).
# ---------------------------------------------------------------------------
def _attention_kernel(counts_ref, blk_ref, q_ref, k_ref, v_ref, mask_ref, skip_ref,
                      o_ref, m_sc, l_sc, acc_sc, *, heads, block_kv):
    i = pl.program_id(0)
    t = pl.program_id(1)
    nk = pl.num_programs(1)

    @pl.when(t == 0)
    def _():
        m_sc[...] = jnp.full_like(m_sc, M_FLOOR)
        l_sc[...] = jnp.zeros_like(l_sc)
        acc_sc[...] = jnp.zeros_like(acc_sc)

    # Only visit kv blocks that actually contain edges for this q tile; padded steps
    # (t >= counts) re-point the mask DMA at the previous block (elided) and skip compute.
    @pl.when(t < counts_ref[i])
    def _():
        kv_blk = blk_ref[i * nk + t]
        start = pl.multiple_of(kv_blk * block_kv, block_kv)
        k_win = k_ref[:, pl.ds(start, block_kv), :]
        v_win = v_ref[:, pl.ds(start, block_kv), :]

        # Heads batched in one contraction; 1/sqrt(d) already folded into Wq.
        s = jnp.einsum("hqd,hkd->hqk", q_ref[...], k_win,
                       preferred_element_type=jnp.float32)
        s = jnp.where(mask_ref[...][None, :, :] != 0, s, MASK_BIAS)

        m_prev = m_sc[...]
        m_new = jnp.maximum(m_prev, jnp.max(s, axis=-1, keepdims=True))
        rescale = jnp.exp(m_prev - m_new)
        p = jnp.exp(s - m_new)                       # non-edges underflow to exactly 0
        l_sc[...] = rescale * l_sc[...] + jnp.sum(p, axis=-1, keepdims=True)
        acc_sc[...] = rescale * acc_sc[...] + jnp.einsum(
            "hqk,hkd->hqd", p.astype(v_win.dtype), v_win,
            preferred_element_type=jnp.float32)
        m_sc[...] = m_new

    # TODO(synk): attention dropout (p=0.1) from the PyTorch module is omitted
    # (deterministic inference path).

    @pl.when(t == nk - 1)
    def _():
        l = l_sc[...]
        # Rows with no incoming edges have l == 0 and acc == 0 -> output 0 (not NaN).
        inv = pl.reciprocal(jnp.where(l > 0.0, l, 1.0), approx=True)
        o = acc_sc[...] * inv                                          # [H, TQ, C]
        merged = jnp.concatenate([o[h] for h in range(heads)], axis=-1)  # [TQ, H*C]
        res = merged + skip_ref[...].astype(jnp.float32)
        o_ref[...] = jnp.maximum(res, 0.0).astype(o_ref.dtype)


def masked_attention(counts, blk, q, k, v, mask, skip, *, heads, ch, block_q, block_kv):
    _, n, _ = q.shape
    hc = heads * ch
    nq = n // block_q
    nk = n // block_kv
    cost = pl.CostEstimate(
        flops=4 * heads * n * n * ch,
        transcendentals=heads * n * n,
        bytes_accessed=(n * n                       # int8 mask (dense upper bound)
                        + 2 * 2 * heads * n * ch    # K, V loaded once (resident)
                        + 3 * 2 * n * hc),          # q, skip, out
    )
    kernel = functools.partial(_attention_kernel, heads=heads, block_kv=block_kv)
    return pl.pallas_call(
        kernel,
        out_shape=jax.ShapeDtypeStruct((n, hc), jnp.bfloat16),
        grid_spec=pltpu.PrefetchScalarGridSpec(
            num_scalar_prefetch=2,
            grid=(nq, nk),
            in_specs=[
                pl.BlockSpec((heads, block_q, ch), lambda i, t, c, b: (0, i, 0)),
                pl.BlockSpec((heads, n, ch), lambda i, t, c, b: (0, 0, 0)),   # K resident
                pl.BlockSpec((heads, n, ch), lambda i, t, c, b: (0, 0, 0)),   # V resident
                pl.BlockSpec((block_q, block_kv),
                             lambda i, t, c, b: (i, b[i * nk + t])),          # sparse walk
                pl.BlockSpec((block_q, hc), lambda i, t, c, b: (i, 0)),
            ],
            out_specs=pl.BlockSpec((block_q, hc), lambda i, t, c, b: (i, 0)),
            scratch_shapes=[
                pltpu.VMEM((heads, block_q, 1), jnp.float32),   # running max
                pltpu.VMEM((heads, block_q, 1), jnp.float32),   # running denom
                pltpu.VMEM((heads, block_q, ch), jnp.float32),  # output accumulator
            ],
        ),
        compiler_params=pltpu.CompilerParams(
            dimension_semantics=("parallel", "arbitrary"),
            vmem_limit_bytes=48 * 1024 * 1024),   # below v7x's 64 MiB physical VMEM
        cost_estimate=cost,
    )(counts, blk, q, k, v, mask, skip)


# ---------------------------------------------------------------------------
# Kernel 3: global_mean_pool (pooling matmul) fused with the final Linear.
# ---------------------------------------------------------------------------
def _pool_fc_kernel(pool_ref, h_ref, w_ref, b_ref, o_ref):
    pooled = jnp.dot(pool_ref[...], h_ref[...].astype(jnp.float32),
                     preferred_element_type=jnp.float32)
    o_ref[...] = jnp.dot(pooled, w_ref[...],
                         preferred_element_type=jnp.float32) + b_ref[...]


def pool_and_fc(pool_mat, h, w, b):
    num_graphs = pool_mat.shape[0]
    out_dim = w.shape[1]
    return pl.pallas_call(
        _pool_fc_kernel,
        out_shape=jax.ShapeDtypeStruct((num_graphs, out_dim), jnp.float32),
        in_specs=[_VMEM] * 4,
        out_specs=_VMEM,
    )(pool_mat, h, w, b)


# ---------------------------------------------------------------------------
# Layer wrapper + model glue.
# ---------------------------------------------------------------------------
def transformer_conv_relu(x_bf16, mask, counts, blk, w_fused, b_fused, *,
                          heads, ch, block_q, block_kv, n_pad):
    proj_rows = n_pad if n_pad <= 4096 else 2048    # projection tile independent of block_q
    q, k, v, skip = fused_projection(x_bf16, w_fused, b_fused,
                                     heads=heads, ch=ch, block_rows=proj_rows)
    return masked_attention(counts, blk, q, k, v, mask, skip,
                            heads=heads, ch=ch, block_q=block_q, block_kv=block_kv)


def _linear_params(key, fan_in, fan_out):
    kw, kb = jax.random.split(key)
    lim = (6.0 / (fan_in + fan_out)) ** 0.5
    w = jax.random.uniform(kw, (fan_in, fan_out), jnp.float32, -lim, lim)
    b = jax.random.uniform(kb, (1, fan_out), jnp.float32, -lim, lim)
    return w, b


def make_conv_params(key, in_dim, heads, ch):
    ks = jax.random.split(key, 4)
    wq, bq = _linear_params(ks[0], in_dim, heads * ch)
    wk, bk = _linear_params(ks[1], in_dim, heads * ch)
    wv, bv = _linear_params(ks[2], in_dim, heads * ch)
    ws, bs = _linear_params(ks[3], in_dim, heads * ch)
    # 1/sqrt(d) is folded into Wq/bq so the attention kernel never multiplies the
    # [H, TQ, TKV] score tensor by a scale.  Fused [Wq|Wk|Wv|Wskip] -> one MXU matmul.
    scale = 1.0 / float(ch) ** 0.5
    return dict(w=jnp.concatenate([wq * scale, wk, wv, ws], axis=1),
                b=jnp.concatenate([bq * scale, bk, bv, bs], axis=1))


def _round_up(x, m):
    return ((x + m - 1) // m) * m


def choose_blocks(n):
    # Small graphs: single block.  Large graphs: 256 q-rows x 2048 kv-cols -- the int8
    # mask tile is 512 KiB and the f32 score intermediate ~8 MiB, comfortably inside
    # v7x's 64 MiB while amortizing per-grid-step overhead; block_q=256 keeps >=2 q
    # tiles for the two v7x TensorCores.
    if n <= 1024:
        n_pad = _round_up(n, 8)
        return n_pad, n_pad, n_pad
    block_q, block_kv = 256, 2048
    n_pad = _round_up(n, block_kv)
    return n_pad, block_q, block_kv


def build_mask(edge_index, n_pad):
    # mask[dst, src] = 1 iff edge src->dst exists (softmax over incoming edges of dst).
    # Built directly as int8 -- no f32 N^2 intermediate.
    src, dst = edge_index[0], edge_index[1]
    return jnp.zeros((n_pad, n_pad), jnp.int8).at[dst, src].set(1)


def build_block_schedule(edge_index, n_pad, block_q, block_kv):
    # For every q tile: how many kv blocks contain edges, and which ones (occupied blocks
    # first, then padding that repeats the last occupied block so its DMA is elided).
    nq, nk = n_pad // block_q, n_pad // block_kv
    src, dst = edge_index[0], edge_index[1]
    occ = jnp.zeros((nq, nk), jnp.bool_).at[dst // block_q, src // block_kv].set(True)
    counts = jnp.sum(occ, axis=1).astype(jnp.int32)
    order = jnp.argsort(jnp.logical_not(occ).astype(jnp.int32), axis=1, stable=True)
    order = order.astype(jnp.int32)
    last = jnp.maximum(counts - 1, 0)[:, None]
    t_idx = jnp.arange(nk, dtype=jnp.int32)[None, :]
    blk = jnp.where(t_idx < counts[:, None], order,
                    jnp.take_along_axis(order, last, axis=1))
    return counts, blk.reshape(-1).astype(jnp.int32)


def build_pool_matrix(batch, num_graphs, n, n_pad):
    # pool[b, i] = 1/|graph b| for real node i in graph b, 0 for padded nodes.
    batch_pad = jnp.full((n_pad,), num_graphs, jnp.int32).at[:n].set(batch)
    one_hot = (batch_pad[None, :] == jnp.arange(num_graphs)[:, None]).astype(jnp.float32)
    counts = jnp.maximum(jnp.sum(one_hot, axis=1, keepdims=True), 1.0)
    return one_hot / counts


def graph_transformer_forward(x, edge_index, batch, params, *, heads, hidden, num_graphs):
    n = x.shape[0]
    n_pad, block_q, block_kv = choose_blocks(n)

    x_pad = jnp.zeros((n_pad, x.shape[1]), jnp.float32).at[:n, :].set(x)
    mask = build_mask(edge_index, n_pad)                                   # int8 [N, N]
    counts, blk = build_block_schedule(edge_index, n_pad, block_q, block_kv)
    pool_mat = build_pool_matrix(batch, num_graphs, n, n_pad)

    h = x_pad.astype(jnp.bfloat16)
    for name in ("conv1", "conv2"):
        p = params[name]
        h = transformer_conv_relu(h, mask, counts, blk,
                                  p["w"].astype(jnp.bfloat16),
                                  p["b"].astype(jnp.bfloat16),
                                  heads=heads, ch=hidden,
                                  block_q=block_q, block_kv=block_kv, n_pad=n_pad)
    return pool_and_fc(pool_mat, h, params["fc_w"], params["fc_b"])


# ---------------------------------------------------------------------------
# Pure-JAX reference (f32).  NOTE: 1/sqrt(d) is already folded into Wq in the params,
# so the reference does not divide the scores again.
# ---------------------------------------------------------------------------
def _reference_forward(x, edge_index, batch, params, *, heads, hidden, num_graphs):
    n = x.shape[0]
    adj = jnp.zeros((n, n), jnp.float32).at[edge_index[1], edge_index[0]].set(1.0)

    def conv(h, w, b):
        proj = h @ w + b
        q, k, v, s = jnp.split(proj, 4, axis=1)
        qh = q.reshape(n, heads, hidden)
        kh = k.reshape(n, heads, hidden)
        vh = v.reshape(n, heads, hidden)
        scores = jnp.einsum("ihd,jhd->hij", qh, kh)          # scale folded into Wq
        masked = jnp.where(adj[None] > 0, scores, -jnp.inf)
        alpha = jax.nn.softmax(masked, axis=-1)
        alpha = jnp.where(adj[None] > 0, alpha, 0.0)
        out = jnp.einsum("hij,jhd->ihd", alpha, vh).reshape(n, heads * hidden)
        return jax.nn.relu(out + s)

    h = conv(x, params["conv1"]["w"], params["conv1"]["b"])
    h = conv(h, params["conv2"]["w"], params["conv2"]["b"])
    one_hot = (batch[None, :] == jnp.arange(num_graphs)[:, None]).astype(jnp.float32)
    pool = one_hot / jnp.maximum(one_hot.sum(axis=1, keepdims=True), 1.0)
    return pool @ h @ params["fc_w"] + params["fc_b"]


if __name__ == "__main__":
    INPUT_DIM, HIDDEN_DIM, OUTPUT_DIM, HEADS = 8, 8, 4, 4
    NUM_GRAPHS, NODES_PER_GRAPH = 2, 8
    N = NUM_GRAPHS * NODES_PER_GRAPH

    key = jax.random.PRNGKey(0)
    k_x, k_attr, k_c1, k_c2, k_fc = jax.random.split(key, 5)

    # data.x, data.edge_index, data.edge_attr, data.batch
    x = jax.random.normal(k_x, (N, INPUT_DIM), jnp.float32)

    # deterministic, duplicate-free edges: each node sends to (i+1) and (i+2) within its graph
    src, dst = [], []
    for g in range(NUM_GRAPHS):
        for i in range(NODES_PER_GRAPH):
            for d in (1, 2):
                src.append(g * NODES_PER_GRAPH + i)
                dst.append(g * NODES_PER_GRAPH + (i + d) % NODES_PER_GRAPH)
    edge_index = jnp.array([src, dst], dtype=jnp.int32)                   # [2, 32]
    edge_attr = jax.random.normal(k_attr, (edge_index.shape[1], 4))       # unused (edge_dim=None)
    batch = jnp.repeat(jnp.arange(NUM_GRAPHS, dtype=jnp.int32), NODES_PER_GRAPH)

    params = {
        "conv1": make_conv_params(k_c1, INPUT_DIM, HEADS, HIDDEN_DIM),
        "conv2": make_conv_params(k_c2, HIDDEN_DIM * HEADS, HEADS, HIDDEN_DIM),
    }
    params["fc_w"], params["fc_b"] = _linear_params(k_fc, HIDDEN_DIM * HEADS, OUTPUT_DIM)

    fwd = jax.jit(functools.partial(graph_transformer_forward,
                                    heads=HEADS, hidden=HIDDEN_DIM,
                                    num_graphs=NUM_GRAPHS))
    out = fwd(x, edge_index, batch, params)
    jax.block_until_ready(out)

    ref = _reference_forward(x, edge_index, batch, params,
                             heads=HEADS, hidden=HIDDEN_DIM, num_graphs=NUM_GRAPHS)
    assert out.shape == (NUM_GRAPHS, OUTPUT_DIM)
    assert bool(jnp.all(jnp.isfinite(out)))
    # bf16 operands + approx reciprocal on the softmax denominator -> ~1e-2 abs error;
    # tolerance tightened from 0.25 to 0.1.
    assert bool(jnp.max(jnp.abs(out - ref)) < 0.1)
    print("KERNEL_OK")
</pallas_src>

<mosaic_0001>
module attributes {stable_mosaic.version = 11 : i64} {
  func.func @_fused_proj_kernel(%arg0: i32, %arg1: memref<16x8xbf16, #tpu.memory_space<vmem>>, %arg2: memref<8x128xbf16, #tpu.memory_space<vmem>>, %arg3: memref<1x128xbf16, #tpu.memory_space<vmem>>, %arg4: memref<4x16x8xbf16, #tpu.memory_space<vmem>>, %arg5: memref<4x16x8xbf16, #tpu.memory_space<vmem>>, %arg6: memref<4x16x8xbf16, #tpu.memory_space<vmem>>, %arg7: memref<16x32xbf16, #tpu.memory_space<vmem>>) attributes {dimension_semantics = [#tpu.dimension_semantics<parallel>], iteration_bounds = array<i64: 1>, scalar_prefetch = 0 : i64, scratch_operands = 0 : i64, tpu.core_type = #tpu.core_type<tc>, window_params = [{transform_indices = @transform_0, window_bounds = array<i64: 16, 8>}, {pipeline_mode = #tpu.pipeline_mode<synchronous>, transform_indices = @transform_1, window_bounds = array<i64: 8, 128>}, {pipeline_mode = #tpu.pipeline_mode<synchronous>, transform_indices = @transform_2, window_bounds = array<i64: 1, 128>}, {transform_indices = @transform_3, window_bounds = array<i64: 4, 16, 8>}, {transform_indices = @transform_4, window_bounds = array<i64: 4, 16, 8>}, {transform_indices = @transform_5, window_bounds = array<i64: 4, 16, 8>}, {transform_indices = @transform_6, window_bounds = array<i64: 16, 32>}]} {
    %c0 = arith.constant 0 : index
    %c0_0 = arith.constant 0 : index
    %0 = vector.load %arg1[%c0, %c0_0] : memref<16x8xbf16, #tpu.memory_space<vmem>>, vector<16x8xbf16>
    %c0_1 = arith.constant 0 : index
    %c0_2 = arith.constant 0 : index
    %1 = vector.load %arg2[%c0_1, %c0_2] : memref<8x128xbf16, #tpu.memory_space<vmem>>, vector<8x128xbf16>
    %cst = arith.constant dense<0.000000e+00> : vector<16x128xf32>
    %2 = tpu.matmul %0, %1, %cst {dimension_numbers = #tpu.dot_dimension_numbers<[1], [0], [0], [1], [0, 0, 1, 1], [], []>} : vector<16x8xbf16>, vector<8x128xbf16>, vector<16x128xf32> -> vector<16x128xf32>
    %c0_3 = arith.constant 0 : index
    %c0_4 = arith.constant 0 : index
    %3 = vector.load %arg3[%c0_3, %c0_4] : memref<1x128xbf16, #tpu.memory_space<vmem>>, vector<1x128xbf16>
    %4 = arith.extf %3 : vector<1x128xbf16> to vector<1x128xf32>
    %5 = vector.broadcast %4 : vector<1x128xf32> to vector<16x128xf32>
    %6 = arith.addf %2, %5 : vector<16x128xf32>
    %7 = arith.truncf %6 : vector<16x128xf32> to vector<16x128xbf16>
    %8 = vector.extract_strided_slice %7 {offsets = [0, 0], sizes = [16, 8], strides = [1, 1]} : vector<16x128xbf16> to vector<16x8xbf16>
    %c0_5 = arith.constant 0 : index
    %c0_6 = arith.constant 0 : index
    %c0_7 = arith.constant 0 : index
    %9 = vector.load %arg4[%c0_5, %c0_6, %c0_7] : memref<4x16x8xbf16, #tpu.memory_space<vmem>>, vector<1x16x8xbf16>
    %10 = vector.shape_cast %9 : vector<1x16x8xbf16> to vector<16x8xbf16>
    %11 = vector.shape_cast %8 : vector<16x8xbf16> to vector<1x16x8xbf16>
    tpu.vector_store %arg4[%c0_5, %c0_6, %c0_7], %11 {strides = array<i32>} : memref<4x16x8xbf16, #tpu.memory_space<vmem>>, vector<1x16x8xbf16>,
    %12 = vector.extract_strided_slice %7 {offsets = [0, 32], sizes = [16, 8], strides = [1, 1]} : vector<16x128xbf16> to vector<16x8xbf16>
    %c0_8 = arith.constant 0 : index
    %c0_9 = arith.constant 0 : index
    %c0_10 = arith.constant 0 : index
    %13 = vector.load %arg5[%c0_8, %c0_9, %c0_10] : memref<4x16x8xbf16, #tpu.memory_space<vmem>>, vector<1x16x8xbf16>
    %14 = vector.shape_cast %13 : vector<1x16x8xbf16> to vector<16x8xbf16>
    %15 = vector.shape_cast %12 : vector<16x8xbf16> to vector<1x16x8xbf16>
    tpu.vector_store %arg5[%c0_8, %c0_9, %c0_10], %15 {strides = array<i32>} : memref<4x16x8xbf16, #tpu.memory_space<vmem>>, vector<1x16x8xbf16>,
    %16 = vector.extract_strided_slice %7 {offsets = [0, 64], sizes = [16, 8], strides = [1, 1]} : vector<16x128xbf16> to vector<16x8xbf16>
    %c0_11 = arith.constant 0 : index
    %c0_12 = arith.constant 0 : index
    %c0_13 = arith.constant 0 : index
    %17 = vector.load %arg6[%c0_11, %c0_12, %c0_13] : memref<4x16x8xbf16, #tpu.memory_space<vmem>>, vector<1x16x8xbf16>
    %18 = vector.shape_cast %17 : vector<1x16x8xbf16> to vector<16x8xbf16>
    %19 = vector.shape_cast %16 : vector<16x8xbf16> to vector<1x16x8xbf16>
    tpu.vector_store %arg6[%c0_11, %c0_12, %c0_13], %19 {strides = array<i32>} : memref<4x16x8xbf16, #tpu.memory_space<vmem>>, vector<1x16x8xbf16>,
    %20 = vector.extract_strided_slice %7 {offsets = [0, 8], sizes = [16, 8], strides = [1, 1]} : vector<16x128xbf16> to vector<16x8xbf16>
    %c1 = arith.constant 1 : index
    %c0_14 = arith.constant 0 : index
    %c0_15 = arith.constant 0 : index
    %21 = vector.load %arg4[%c1, %c0_14, %c0_15] : memref<4x16x8xbf16, #tpu.memory_space<vmem>>, vector<1x16x8xbf16>
    %22 = vector.shape_cast %21 : vector<1x16x8xbf16> to vector<16x8xbf16>
    %23 = vector.shape_cast %20 : vector<16x8xbf16> to vector<1x16x8xbf16>
    tpu.vector_store %arg4[%c1, %c0_14, %c0_15], %23 {strides = array<i32>} : memref<4x16x8xbf16, #tpu.memory_space<vmem>>, vector<1x16x8xbf16>,
    %24 = vector.extract_strided_slice %7 {offsets = [0, 40], sizes = [16, 8], strides = [1, 1]} : vector<16x128xbf16> to vector<16x8xbf16>
    %c1_16 = arith.constant 1 : index
    %c0_17 = arith.constant 0 : index
    %c0_18 = arith.constant 0 : index
    %25 = vector.load %arg5[%c1_16, %c0_17, %c0_18] : memref<4x16x8xbf16, #tpu.memory_space<vmem>>, vector<1x16x8xbf16>
    %26 = vector.shape_cast %25 : vector<1x16x8xbf16> to vector<16x8xbf16>
    %27 = vector.shape_cast %24 : vector<16x8xbf16> to vector<1x16x8xbf16>
    tpu.vector_store %arg5[%c1_16, %c0_17, %c0_18], %27 {strides = array<i32>} : memref<4x16x8xbf16, #tpu.memory_space<vmem>>, vector<1x16x8xbf16>,
    %28 = vector.extract_strided_slice %7 {offsets = [0, 72], sizes = [16, 8], strides = [1, 1]} : vector<16x128xbf16> to vector<16x8xbf16>
    %c1_19 = arith.constant 1 : index
    %c0_20 = arith.constant 0 : index
    %c0_21 = arith.constant 0 : index
    %29 = vector.load %arg6[%c1_19, %c0_20, %c0_21] : memref<4x16x8xbf16, #tpu.memory_space<vmem>>, vector<1x16x8xbf16>
    %30 = vector.shape_cast %29 : vector<1x16x8xbf16> to vector<16x8xbf16>
    %31 = vector.shape_cast %28 : vector<16x8xbf16> to vector<1x16x8xbf16>
    tpu.vector_store %arg6[%c1_19, %c0_20, %c0_21], %31 {strides = array<i32>} : memref<4x16x8xbf16, #tpu.memory_space<vmem>>, vector<1x16x8xbf16>,
    %32 = vector.extract_strided_slice %7 {offsets = [0, 16], sizes = [16, 8], strides = [1, 1]} : vector<16x128xbf16> to vector<16x8xbf16>
    %c2 = arith.constant 2 : index
    %c0_22 = arith.constant 0 : index
    %c0_23 = arith.constant 0 : index
    %33 = vector.load %arg4[%c2, %c0_22, %c0_23] : memref<4x16x8xbf16, #tpu.memory_space<vmem>>, vector<1x16x8xbf16>
    %34 = vector.shape_cast %33 : vector<1x16x8xbf16> to vector<16x8xbf16>
    %35 = vector.shape_cast %32 : vector<16x8xbf16> to vector<1x16x8xbf16>
    tpu.vector_store %arg4[%c2, %c0_22, %c0_23], %35 {strides = array<i32>} : memref<4x16x8xbf16, #tpu.memory_space<vmem>>, vector<1x16x8xbf16>,
    %36 = vector.extract_strided_slice %7 {offsets = [0, 48], sizes = [16, 8], strides = [1, 1]} : vector<16x128xbf16> to vector<16x8xbf16>
    %c2_24 = arith.constant 2 : index
    %c0_25 = arith.constant 0 : index
    %c0_26 = arith.constant 0 : index
    %37 = vector.load %arg5[%c2_24, %c0_25, %c0_26] : memref<4x16x8xbf16, #tpu.memory_space<vmem>>, vector<1x16x8xbf16>
    %38 = vector.shape_cast %37 : vector<1x16x8xbf16> to vector<16x8xbf16>
    %39 = vector.shape_cast %36 : vector<16x8xbf16> to vector<1x16x8xbf16>
    tpu.vector_store %arg5[%c2_24, %c0_25, %c0_26], %39 {strides = array<i32>} : memref<4x16x8xbf16, #tpu.memory_space<vmem>>, vector<1x16x8xbf16>,
    %40 = vector.extract_strided_slice %7 {offsets = [0, 80], sizes = [16, 8], strides = [1, 1]} : vector<16x128xbf16> to vector<16x8xbf16>
    %c2_27 = arith.constant 2 : index
    %c0_28 = arith.constant 0 : index
    %c0_29 = arith.constant 0 : index
    %41 = vector.load %arg6[%c2_27, %c0_28, %c0_29] : memref<4x16x8xbf16, #tpu.memory_space<vmem>>, vector<1x16x8xbf16>
    %42 = vector.shape_cast %41 : vector<1x16x8xbf16> to vector<16x8xbf16>
    %43 = vector.shape_cast %40 : vector<16x8xbf16> to vector<1x16x8xbf16>
    tpu.vector_store %arg6[%c2_27, %c0_28, %c0_29], %43 {strides = array<i32>} : memref<4x16x8xbf16, #tpu.memory_space<vmem>>, vector<1x16x8xbf16>,
    %44 = vector.extract_strided_slice %7 {offsets = [0, 24], sizes = [16, 8], strides = [1, 1]} : vector<16x128xbf16> to vector<16x8xbf16>
    %c3 = arith.constant 3 : index
    %c0_30 = arith.constant 0 : index
    %c0_31 = arith.constant 0 : index
    %45 = vector.load %arg4[%c3, %c0_30, %c0_31] : memref<4x16x8xbf16, #tpu.memory_space<vmem>>, vector<1x16x8xbf16>
    %46 = vector.shape_cast %45 : vector<1x16x8xbf16> to vector<16x8xbf16>
    %47 = vector.shape_cast %44 : vector<16x8xbf16> to vector<1x16x8xbf16>
    tpu.vector_store %arg4[%c3, %c0_30, %c0_31], %47 {strides = array<i32>} : memref<4x16x8xbf16, #tpu.memory_space<vmem>>, vector<1x16x8xbf16>,
    %48 = vector.extract_strided_slice %7 {offsets = [0, 56], sizes = [16, 8], strides = [1, 1]} : vector<16x128xbf16> to vector<16x8xbf16>
    %c3_32 = arith.constant 3 : index
    %c0_33 = arith.constant 0 : index
    %c0_34 = arith.constant 0 : index
    %49 = vector.load %arg5[%c3_32, %c0_33, %c0_34] : memref<4x16x8xbf16, #tpu.memory_space<vmem>>, vector<1x16x8xbf16>
    %50 = vector.shape_cast %49 : vector<1x16x8xbf16> to vector<16x8xbf16>
    %51 = vector.shape_cast %48 : vector<16x8xbf16> to vector<1x16x8xbf16>
    tpu.vector_store %arg5[%c3_32, %c0_33, %c0_34], %51 {strides = array<i32>} : memref<4x16x8xbf16, #tpu.memory_space<vmem>>, vector<1x16x8xbf16>,
    %52 = vector.extract_strided_slice %7 {offsets = [0, 88], sizes = [16, 8], strides = [1, 1]} : vector<16x128xbf16> to vector<16x8xbf16>
    %c3_35 = arith.constant 3 : index
    %c0_36 = arith.constant 0 : index
    %c0_37 = arith.constant 0 : index
    %53 = vector.load %arg6[%c3_35, %c0_36, %c0_37] : memref<4x16x8xbf16, #tpu.memory_space<vmem>>, vector<1x16x8xbf16>
    %54 = vector.shape_cast %53 : vector<1x16x8xbf16> to vector<16x8xbf16>
    %55 = vector.shape_cast %52 : vector<16x8xbf16> to vector<1x16x8xbf16>
    tpu.vector_store %arg6[%c3_35, %c0_36, %c0_37], %55 {strides = array<i32>} : memref<4x16x8xbf16, #tpu.memory_space<vmem>>, vector<1x16x8xbf16>,
    %56 = vector.extract_strided_slice %7 {offsets = [0, 96], sizes = [16, 32], strides = [1, 1]} : vector<16x128xbf16> to vector<16x32xbf16>
    %c0_38 = arith.constant 0 : index
    %c0_39 = arith.constant 0 : index
    %57 = vector.load %arg7[%c0_38, %c0_39] : memref<16x32xbf16, #tpu.memory_space<vmem>>, vector<16x32xbf16>
    tpu.vector_store %arg7[%c0_38, %c0_39], %56 {strides = array<i32>} : memref<16x32xbf16, #tpu.memory_space<vmem>>, vector<16x32xbf16>,
    return
  }
  func.func @transform_0(%arg0: i32) -> (i32, i32) {
    %c0_i32 = arith.constant 0 : i32
    %c0_i32_0 = arith.constant 0 : i32
    return %arg0, %c0_i32 : i32, i32
  }
  func.func @transform_1(%arg0: i32) -> (i32, i32) {
    %c0_i32 = arith.constant 0 : i32
    %c0_i32_0 = arith.constant 0 : i32
    %c0_i32_1 = arith.constant 0 : i32
    return %c0_i32, %c0_i32_0 : i32, i32
  }
  func.func @transform_2(%arg0: i32) -> (i32, i32) {
    %c0_i32 = arith.constant 0 : i32
    %c0_i32_0 = arith.constant 0 : i32
    %c0_i32_1 = arith.constant 0 : i32
    return %c0_i32, %c0_i32_0 : i32, i32
  }
  func.func @transform_3(%arg0: i32) -> (i32, i32, i32) {
    %c0_i32 = arith.constant 0 : i32
    %c0_i32_0 = arith.constant 0 : i32
    %c0_i32_1 = arith.constant 0 : i32
    return %c0_i32, %arg0, %c0_i32_0 : i32, i32, i32
  }
  func.func @transform_4(%arg0: i32) -> (i32, i32, i32) {
    %c0_i32 = arith.constant 0 : i32
    %c0_i32_0 = arith.constant 0 : i32
    %c0_i32_1 = arith.constant 0 : i32
    return %c0_i32, %arg0, %c0_i32_0 : i32, i32, i32
  }
  func.func @transform_5(%arg0: i32) -> (i32, i32, i32) {
    %c0_i32 = arith.constant 0 : i32
    %c0_i32_0 = arith.constant 0 : i32
    %c0_i32_1 = arith.constant 0 : i32
    return %c0_i32, %arg0, %c0_i32_0 : i32, i32, i32
  }
  func.func @transform_6(%arg0: i32) -> (i32, i32) {
    %c0_i32 = arith.constant 0 : i32
    %c0_i32_0 = arith.constant 0 : i32
    return %arg0, %c0_i32 : i32, i32
  }
}

module attributes {stable_mosaic.version = 11 : i64} {
  func.func @_fused_proj_kernel(%arg0: i32, %arg1: memref<16x32xbf16, #tpu.memory_space<vmem>>, %arg2: memref<32x128xbf16, #tpu.memory_space<vmem>>, %arg3: memref<1x128xbf16, #tpu.memory_space<vmem>>, %arg4: memref<4x16x8xbf16, #tpu.memory_space<vmem>>, %arg5: memref<4x16x8xbf16, #tpu.memory_space<vmem>>, %arg6: memref<4x16x8xbf16, #tpu.memory_space<vmem>>, %arg7: memref<16x32xbf16, #tpu.memory_space<vmem>>) attributes {dimension_semantics = [#tpu.dimension_semantics<parallel>], iteration_bounds = array<i64: 1>, scalar_prefetch = 0 : i64, scratch_operands = 0 : i64, tpu.core_type = #tpu.core_type<tc>, window_params = [{transform_indices = @transform_0, window_bounds = array<i64: 16, 32>}, {pipeline_mode = #tpu.pipeline_mode<synchronous>, transform_indices = @transform_1, window_bounds = array<i64: 32, 128>}, {pipeline_mode = #tpu.pipeline_mode<synchronous>, transform_indices = @transform_2, window_bounds = array<i64: 1, 128>}, {transform_indices = @transform_3, window_bounds = array<i64: 4, 16, 8>}, {transform_indices = @transform_4, window_bounds = array<i64: 4, 16, 8>}, {transform_indices = @transform_5, window_bounds = array<i64: 4, 16, 8>}, {transform_indices = @transform_6, window_bounds = array<i64: 16, 32>}]} {
    %c0 = arith.constant 0 : index
    %c0_0 = arith.constant 0 : index
    %0 = vector.load %arg1[%c0, %c0_0] : memref<16x32xbf16, #tpu.memory_space<vmem>>, vector<16x32xbf16>
    %c0_1 = arith.constant 0 : index
    %c0_2 = arith.constant 0 : index
    %1 = vector.load %arg2[%c0_1, %c0_2] : memref<32x128xbf16, #tpu.memory_space<vmem>>, vector<32x128xbf16>
    %cst = arith.constant dense<0.000000e+00> : vector<16x128xf32>
    %2 = tpu.matmul %0, %1, %cst {dimension_numbers = #tpu.dot_dimension_numbers<[1], [0], [0], [1], [0, 0, 1, 1], [], []>} : vector<16x32xbf16>, vector<32x128xbf16>, vector<16x128xf32> -> vector<16x128xf32>
    %c0_3 = arith.constant 0 : index
    %c0_4 = arith.constant 0 : index
    %3 = vector.load %arg3[%c0_3, %c0_4] : memref<1x128xbf16, #tpu.memory_space<vmem>>, vector<1x128xbf16>
    %4 = arith.extf %3 : vector<1x128xbf16> to vector<1x128xf32>
    %5 = vector.broadcast %4 : vector<1x128xf32> to vector<16x128xf32>
    %6 = arith.addf %2, %5 : vector<16x128xf32>
    %7 = arith.truncf %6 : vector<16x128xf32> to vector<16x128xbf16>
    %8 = vector.extract_strided_slice %7 {offsets = [0, 0], sizes = [16, 8], strides = [1, 1]} : vector<16x128xbf16> to vector<16x8xbf16>
    %c0_5 = arith.constant 0 : index
    %c0_6 = arith.constant 0 : index
    %c0_7 = arith.constant 0 : index
    %9 = vector.load %arg4[%c0_5, %c0_6, %c0_7] : memref<4x16x8xbf16, #tpu.memory_space<vmem>>, vector<1x16x8xbf16>
    %10 = vector.shape_cast %9 : vector<1x16x8xbf16> to vector<16x8xbf16>
    %11 = vector.shape_cast %8 : vector<16x8xbf16> to vector<1x16x8xbf16>
    tpu.vector_store %arg4[%c0_5, %c0_6, %c0_7], %11 {strides = array<i32>} : memref<4x16x8xbf16, #tpu.memory_space<vmem>>, vector<1x16x8xbf16>,
    %12 = vector.extract_strided_slice %7 {offsets = [0, 32], sizes = [16, 8], strides = [1, 1]} : vector<16x128xbf16> to vector<16x8xbf16>
    %c0_8 = arith.constant 0 : index
    %c0_9 = arith.constant 0 : index
    %c0_10 = arith.constant 0 : index
    %13 = vector.load %arg5[%c0_8, %c0_9, %c0_10] : memref<4x16x8xbf16, #tpu.memory_space<vmem>>, vector<1x16x8xbf16>
    %14 = vector.shape_cast %13 : vector<1x16x8xbf16> to vector<16x8xbf16>
    %15 = vector.shape_cast %12 : vector<16x8xbf16> to vector<1x16x8xbf16>
    tpu.vector_store %arg5[%c0_8, %c0_9, %c0_10], %15 {strides = array<i32>} : memref<4x16x8xbf16, #tpu.memory_space<vmem>>, vector<1x16x8xbf16>,
    %16 = vector.extract_strided_slice %7 {offsets = [0, 64], sizes = [16, 8], strides = [1, 1]} : vector<16x128xbf16> to vector<16x8xbf16>
    %c0_11 = arith.constant 0 : index
    %c0_12 = arith.constant 0 : index
    %c0_13 = arith.constant 0 : index
    %17 = vector.load %arg6[%c0_11, %c0_12, %c0_13] : memref<4x16x8xbf16, #tpu.memory_space<vmem>>, vector<1x16x8xbf16>
    %18 = vector.shape_cast %17 : vector<1x16x8xbf16> to vector<16x8xbf16>
    %19 = vector.shape_cast %16 : vector<16x8xbf16> to vector<1x16x8xbf16>
    tpu.vector_store %arg6[%c0_11, %c0_12, %c0_13], %19 {strides = array<i32>} : memref<4x16x8xbf16, #tpu.memory_space<vmem>>, vector<1x16x8xbf16>,
    %20 = vector.extract_strided_slice %7 {offsets = [0, 8], sizes = [16, 8], strides = [1, 1]} : vector<16x128xbf16> to vector<16x8xbf16>
    %c1 = arith.constant 1 : index
    %c0_14 = arith.constant 0 : index
    %c0_15 = arith.constant 0 : index
    %21 = vector.load %arg4[%c1, %c0_14, %c0_15] : memref<4x16x8xbf16, #tpu.memory_space<vmem>>, vector<1x16x8xbf16>
    %22 = vector.shape_cast %21 : vector<1x16x8xbf16> to vector<16x8xbf16>
    %23 = vector.shape_cast %20 : vector<16x8xbf16> to vector<1x16x8xbf16>
    tpu.vector_store %arg4[%c1, %c0_14, %c0_15], %23 {strides = array<i32>} : memref<4x16x8xbf16, #tpu.memory_space<vmem>>, vector<1x16x8xbf16>,
    %24 = vector.extract_strided_slice %7 {offsets = [0, 40], sizes = [16, 8], strides = [1, 1]} : vector<16x128xbf16> to vector<16x8xbf16>
    %c1_16 = arith.constant 1 : index
    %c0_17 = arith.constant 0 : index
    %c0_18 = arith.constant 0 : index
    %25 = vector.load %arg5[%c1_16, %c0_17, %c0_18] : memref<4x16x8xbf16, #tpu.memory_space<vmem>>, vector<1x16x8xbf16>
    %26 = vector.shape_cast %25 : vector<1x16x8xbf16> to vector<16x8xbf16>
    %27 = vector.shape_cast %24 : vector<16x8xbf16> to vector<1x16x8xbf16>
    tpu.vector_store %arg5[%c1_16, %c0_17, %c0_18], %27 {strides = array<i32>} : memref<4x16x8xbf16, #tpu.memory_space<vmem>>, vector<1x16x8xbf16>,
    %28 = vector.extract_strided_slice %7 {offsets = [0, 72], sizes = [16, 8], strides = [1, 1]} : vector<16x128xbf16> to vector<16x8xbf16>
    %c1_19 = arith.constant 1 : index
    %c0_20 = arith.constant 0 : index
    %c0_21 = arith.constant 0 : index
    %29 = vector.load %arg6[%c1_19, %c0_20, %c0_21] : memref<4x16x8xbf16, #tpu.memory_space<vmem>>, vector<1x16x8xbf16>
    %30 = vector.shape_cast %29 : vector<1x16x8xbf16> to vector<16x8xbf16>
    %31 = vector.shape_cast %28 : vector<16x8xbf16> to vector<1x16x8xbf16>
    tpu.vector_store %arg6[%c1_19, %c0_20, %c0_21], %31 {strides = array<i32>} : memref<4x16x8xbf16, #tpu.memory_space<vmem>>, vector<1x16x8xbf16>,
    %32 = vector.extract_strided_slice %7 {offsets = [0, 16], sizes = [16, 8], strides = [1, 1]} : vector<16x128xbf16> to vector<16x8xbf16>
    %c2 = arith.constant 2 : index
    %c0_22 = arith.constant 0 : index
    %c0_23 = arith.constant 0 : index
    %33 = vector.load %arg4[%c2, %c0_22, %c0_23] : memref<4x16x8xbf16, #tpu.memory_space<vmem>>, vector<1x16x8xbf16>
    %34 = vector.shape_cast %33 : vector<1x16x8xbf16> to vector<16x8xbf16>
    %35 = vector.shape_cast %32 : vector<16x8xbf16> to vector<1x16x8xbf16>
    tpu.vector_store %arg4[%c2, %c0_22, %c0_23], %35 {strides = array<i32>} : memref<4x16x8xbf16, #tpu.memory_space<vmem>>, vector<1x16x8xbf16>,
    %36 = vector.extract_strided_slice %7 {offsets = [0, 48], sizes = [16, 8], strides = [1, 1]} : vector<16x128xbf16> to vector<16x8xbf16>
    %c2_24 = arith.constant 2 : index
    %c0_25 = arith.constant 0 : index
    %c0_26 = arith.constant 0 : index
    %37 = vector.load %arg5[%c2_24, %c0_25, %c0_26] : memref<4x16x8xbf16, #tpu.memory_space<vmem>>, vector<1x16x8xbf16>
    %38 = vector.shape_cast %37 : vector<1x16x8xbf16> to vector<16x8xbf16>
    %39 = vector.shape_cast %36 : vector<16x8xbf16> to vector<1x16x8xbf16>
    tpu.vector_store %arg5[%c2_24, %c0_25, %c0_26], %39 {strides = array<i32>} : memref<4x16x8xbf16, #tpu.memory_space<vmem>>, vector<1x16x8xbf16>,
    %40 = vector.extract_strided_slice %7 {offsets = [0, 80], sizes = [16, 8], strides = [1, 1]} : vector<16x128xbf16> to vector<16x8xbf16>
    %c2_27 = arith.constant 2 : index
    %c0_28 = arith.constant 0 : index
    %c0_29 = arith.constant 0 : index
    %41 = vector.load %arg6[%c2_27, %c0_28, %c0_29] : memref<4x16x8xbf16, #tpu.memory_space<vmem>>, vector<1x16x8xbf16>
    %42 = vector.shape_cast %41 : vector<1x16x8xbf16> to vector<16x8xbf16>
    %43 = vector.shape_cast %40 : vector<16x8xbf16> to vector<1x16x8xbf16>
    tpu.vector_store %arg6[%c2_27, %c0_28, %c0_29], %43 {strides = array<i32>} : memref<4x16x8xbf16, #tpu.memory_space<vmem>>, vector<1x16x8xbf16>,
    %44 = vector.extract_strided_slice %7 {offsets = [0, 24], sizes = [16, 8], strides = [1, 1]} : vector<16x128xbf16> to vector<16x8xbf16>
    %c3 = arith.constant 3 : index
    %c0_30 = arith.constant 0 : index
    %c0_31 = arith.constant 0 : index
    %45 = vector.load %arg4[%c3, %c0_30, %c0_31] : memref<4x16x8xbf16, #tpu.memory_space<vmem>>, vector<1x16x8xbf16>
    %46 = vector.shape_cast %45 : vector<1x16x8xbf16> to vector<16x8xbf16>
    %47 = vector.shape_cast %44 : vector<16x8xbf16> to vector<1x16x8xbf16>
    tpu.vector_store %arg4[%c3, %c0_30, %c0_31], %47 {strides = array<i32>} : memref<4x16x8xbf16, #tpu.memory_space<vmem>>, vector<1x16x8xbf16>,
    %48 = vector.extract_strided_slice %7 {offsets = [0, 56], sizes = [16, 8], strides = [1, 1]} : vector<16x128xbf16> to vector<16x8xbf16>
    %c3_32 = arith.constant 3 : index
    %c0_33 = arith.constant 0 : index
    %c0_34 = arith.constant 0 : index
    %49 = vector.load %arg5[%c3_32, %c0_33, %c0_34] : memref<4x16x8xbf16, #tpu.memory_space<vmem>>, vector<1x16x8xbf16>
    %50 = vector.shape_cast %49 : vector<1x16x8xbf16> to vector<16x8xbf16>
    %51 = vector.shape_cast %48 : vector<16x8xbf16> to vector<1x16x8xbf16>
    tpu.vector_store %arg5[%c3_32, %c0_33, %c0_34], %51 {strides = array<i32>} : memref<4x16x8xbf16, #tpu.memory_space<vmem>>, vector<1x16x8xbf16>,
    %52 = vector.extract_strided_slice %7 {offsets = [0, 88], sizes = [16, 8], strides = [1, 1]} : vector<16x128xbf16> to vector<16x8xbf16>
    %c3_35 = arith.constant 3 : index
    %c0_36 = arith.constant 0 : index
    %c0_37 = arith.constant 0 : index
    %53 = vector.load %arg6[%c3_35, %c0_36, %c0_37] : memref<4x16x8xbf16, #tpu.memory_space<vmem>>, vector<1x16x8xbf16>
    %54 = vector.shape_cast %53 : vector<1x16x8xbf16> to vector<16x8xbf16>
    %55 = vector.shape_cast %52 : vector<16x8xbf16> to vector<1x16x8xbf16>
    tpu.vector_store %arg6[%c3_35, %c0_36, %c0_37], %55 {strides = array<i32>} : memref<4x16x8xbf16, #tpu.memory_space<vmem>>, vector<1x16x8xbf16>,
    %56 = vector.extract_strided_slice %7 {offsets = [0, 96], sizes = [16, 32], strides = [1, 1]} : vector<16x128xbf16> to vector<16x32xbf16>
    %c0_38 = arith.constant 0 : index
    %c0_39 = arith.constant 0 : index
    %57 = vector.load %arg7[%c0_38, %c0_39] : memref<16x32xbf16, #tpu.memory_space<vmem>>, vector<16x32xbf16>
    tpu.vector_store %arg7[%c0_38, %c0_39], %56 {strides = array<i32>} : memref<16x32xbf16, #tpu.memory_space<vmem>>, vector<16x32xbf16>,
    return
  }
  func.func @transform_0(%arg0: i32) -> (i32, i32) {
    %c0_i32 = arith.constant 0 : i32
    %c0_i32_0 = arith.constant 0 : i32
    return %arg0, %c0_i32 : i32, i32
  }
  func.func @transform_1(%arg0: i32) -> (i32, i32) {
    %c0_i32 = arith.constant 0 : i32
    %c0_i32_0 = arith.constant 0 : i32
    %c0_i32_1 = arith.constant 0 : i32
    return %c0_i32, %c0_i32_0 : i32, i32
  }
  func.func @transform_2(%arg0: i32) -> (i32, i32) {
    %c0_i32 = arith.constant 0 : i32
    %c0_i32_0 = arith.constant 0 : i32
    %c0_i32_1 = arith.constant 0 : i32
    return %c0_i32, %c0_i32_0 : i32, i32
  }
  func.func @transform_3(%arg0: i32) -> (i32, i32, i32) {
    %c0_i32 = arith.constant 0 : i32
    %c0_i32_0 = arith.constant 0 : i32
    %c0_i32_1 = arith.constant 0 : i32
    return %c0_i32, %arg0, %c0_i32_0 : i32, i32, i32
  }
  func.func @transform_4(%arg0: i32) -> (i32, i32, i32) {
    %c0_i32 = arith.constant 0 : i32
    %c0_i32_0 = arith.constant 0 : i32
    %c0_i32_1 = arith.constant 0 : i32
    return %c0_i32, %arg0, %c0_i32_0 : i32, i32, i32
  }
  func.func @transform_5(%arg0: i32) -> (i32, i32, i32) {
    %c0_i32 = arith.constant 0 : i32
    %c0_i32_0 = arith.constant 0 : i32
    %c0_i32_1 = arith.constant 0 : i32
    return %c0_i32, %arg0, %c0_i32_0 : i32, i32, i32
  }
  func.func @transform_6(%arg0: i32) -> (i32, i32) {
    %c0_i32 = arith.constant 0 : i32
    %c0_i32_0 = arith.constant 0 : i32
    return %arg0, %c0_i32 : i32, i32
  }
}

module attributes {stable_mosaic.version = 11 : i64} {
  func.func @_attention_kernel(%arg0: i32, %arg1: i32, %arg2: memref<1xi32, #tpu.memory_space<smem>>, %arg3: memref<1xi32, #tpu.memory_space<smem>>, %arg4: memref<4x16x8xbf16, #tpu.memory_space<vmem>>, %arg5: memref<4x16x8xbf16, #tpu.memory_space<vmem>>, %arg6: memref<4x16x8xbf16, #tpu.memory_space<vmem>>, %arg7: memref<16x16xi8, #tpu.memory_space<vmem>>, %arg8: memref<16x32xbf16, #tpu.memory_space<vmem>>, %arg9: memref<16x32xbf16, #tpu.memory_space<vmem>>, %arg10: memref<4x16x1xf32, #tpu.memory_space<vmem>>, %arg11: memref<4x16x1xf32, #tpu.memory_space<vmem>>, %arg12: memref<4x16x8xf32, #tpu.memory_space<vmem>>) attributes {dimension_semantics = [#tpu.dimension_semantics<parallel>, #tpu.dimension_semantics<arbitrary>], iteration_bounds = array<i64: 1, 1>, scalar_prefetch = 2 : i64, scratch_operands = 3 : i64, tpu.core_type = #tpu.core_type<tc>, window_params = [{transform_indices = @transform_0, window_bounds = array<i64: 4, 16, 8>}, {pipeline_mode = #tpu.pipeline_mode<synchronous>, transform_indices = @transform_1, window_bounds = array<i64: 4, 16, 8>}, {pipeline_mode = #tpu.pipeline_mode<synchronous>, transform_indices = @transform_2, window_bounds = array<i64: 4, 16, 8>}, {transform_indices = @transform_3, window_bounds = array<i64: 16, 16>}, {transform_indices = @transform_4, window_bounds = array<i64: 16, 32>}, {transform_indices = @transform_5, window_bounds = array<i64: 16, 32>}]} {
    %c0_i32 = arith.constant 0 : i32
    %0 = arith.cmpi eq, %arg1, %c0_i32 : i32
    %1 = arith.extui %0 : i1 to i32
    %c0_i32_0 = arith.constant 0 : i32
    %2 = arith.cmpi ne, %1, %c0_i32_0 : i32
    scf.if %2 {
      %cst = arith.constant -1.000000e+20 : f32
      %11 = vector.broadcast %cst : f32 to vector<4x16x1xf32>
      %c0 = arith.constant 0 : index
      %c0_4 = arith.constant 0 : index
      %c0_5 = arith.constant 0 : index
      %12 = vector.load %arg10[%c0, %c0_4, %c0_5] : memref<4x16x1xf32, #tpu.memory_space<vmem>>, vector<4x16x1xf32>
      tpu.vector_store %arg10[%c0, %c0_4, %c0_5], %11 {strides = array<i32>} : memref<4x16x1xf32, #tpu.memory_space<vmem>>, vector<4x16x1xf32>,
      %cst_6 = arith.constant 0.000000e+00 : f32
      %13 = vector.broadcast %cst_6 : f32 to vector<4x16x1xf32>
      %c0_7 = arith.constant 0 : index
      %c0_8 = arith.constant 0 : index
      %c0_9 = arith.constant 0 : index
      %14 = vector.load %arg11[%c0_7, %c0_8, %c0_9] : memref<4x16x1xf32, #tpu.memory_space<vmem>>, vector<4x16x1xf32>
      tpu.vector_store %arg11[%c0_7, %c0_8, %c0_9], %13 {strides = array<i32>} : memref<4x16x1xf32, #tpu.memory_space<vmem>>, vector<4x16x1xf32>,
      %cst_10 = arith.constant 0.000000e+00 : f32
      %15 = vector.broadcast %cst_10 : f32 to vector<4x16x8xf32>
      %c0_11 = arith.constant 0 : index
      %c0_12 = arith.constant 0 : index
      %c0_13 = arith.constant 0 : index
      %16 = vector.load %arg12[%c0_11, %c0_12, %c0_13] : memref<4x16x8xf32, #tpu.memory_space<vmem>>, vector<4x16x8xf32>
      tpu.vector_store %arg12[%c0_11, %c0_12, %c0_13], %15 {strides = array<i32>} : memref<4x16x8xf32, #tpu.memory_space<vmem>>, vector<4x16x8xf32>,
    } else {
    }
    %3 = arith.index_cast %arg0 : i32 to index
    %4 = memref.load %arg2[%3] : memref<1xi32, #tpu.memory_space<smem>>
    %5 = arith.cmpi slt, %arg1, %4 : i32
    %6 = arith.extui %5 : i1 to i32
    %c0_i32_1 = arith.constant 0 : i32
    %7 = arith.cmpi ne, %6, %c0_i32_1 : i32
    scf.if %7 {
      %c1_i32 = arith.constant 1 : i32
      %11 = arith.muli %arg0, %c1_i32 : i32
      %12 = arith.addi %11, %arg1 : i32
      %13 = arith.index_cast %12 : i32 to index
      %14 = memref.load %arg3[%13] : memref<1xi32, #tpu.memory_space<smem>>
      %c16_i32 = arith.constant 16 : i32
      %15 = arith.muli %14, %c16_i32 : i32
      %16 = tpu.assume_multiple %15, 16 : i32
      %c0 = arith.constant 0 : index
      %17 = arith.index_cast %16 : i32 to index
      %c0_4 = arith.constant 0 : index
      %18 = vector.load %arg5[%c0, %17, %c0_4] : memref<4x16x8xbf16, #tpu.memory_space<vmem>>, vector<4x16x8xbf16>
      %c0_5 = arith.constant 0 : index
      %19 = arith.index_cast %16 : i32 to index
      %c0_6 = arith.constant 0 : index
      %20 = vector.load %arg6[%c0_5, %19, %c0_6] : memref<4x16x8xbf16, #tpu.memory_space<vmem>>, vector<4x16x8xbf16>
      %c0_7 = arith.constant 0 : index
      %c0_8 = arith.constant 0 : index
      %c0_9 = arith.constant 0 : index
      %21 = vector.load %arg4[%c0_7, %c0_8, %c0_9] : memref<4x16x8xbf16, #tpu.memory_space<vmem>>, vector<4x16x8xbf16>
      "tpu.trace_start"() <{level = 10 : i32, message = "hqd,hkd->hqk"}> : () -> ()
      %cst = arith.constant dense<0.000000e+00> : vector<4x16x16xf32>
      %22 = tpu.matmul %21, %18, %cst {dimension_numbers = #tpu.dot_dimension_numbers<[2], [2], [1], [1], [0, 0, 0, 1, 1, 1], [0], [0]>} : vector<4x16x8xbf16>, vector<4x16x8xbf16>, vector<4x16x16xf32> -> vector<4x16x16xf32>
      "tpu.trace_stop"() : () -> ()
      %c0_10 = arith.constant 0 : index
      %c0_11 = arith.constant 0 : index
      %23 = vector.load %arg7[%c0_10, %c0_11] : memref<16x16xi8, #tpu.memory_space<vmem>>, vector<16x16xi8>
      %24 = vector.shape_cast %23 : vector<16x16xi8> to vector<1x16x16xi8>
      %c0_i8 = arith.constant 0 : i8
      %25 = vector.broadcast %c0_i8 : i8 to vector<1x16x16xi8>
      %26 = arith.cmpi ne, %24, %25 : vector<1x16x16xi8>
      %cst_12 = arith.constant -1.000000e+30 : f32
      %27 = vector.shape_cast %26 : vector<1x16x16xi1> to vector<1x16x16xi1>
      %28 = vector.broadcast %27 : vector<1x16x16xi1> to vector<4x16x16xi1>
      %29 = vector.broadcast %cst_12 : f32 to vector<4x16x16xf32>
      %30 = arith.select %28, %22, %29 : vector<4x16x16xi1>, vector<4x16x16xf32>
      %c0_13 = arith.constant 0 : index
      %c0_14 = arith.constant 0 : index
      %c0_15 = arith.constant 0 : index
      %31 = vector.load %arg10[%c0_13, %c0_14, %c0_15] : memref<4x16x1xf32, #tpu.memory_space<vmem>>, vector<4x16x1xf32>
      %cst_16 = arith.constant dense<0xFF800000> : vector<4x16xf32>
      %32 = vector.multi_reduction <maximumf>, %30, %cst_16 [2] : vector<4x16x16xf32> to vector<4x16xf32>
      %33 = vector.shape_cast %32 : vector<4x16xf32> to vector<4x16x1xf32>
      %34 = arith.maximumf %31, %33 : vector<4x16x1xf32>
      %35 = arith.subf %31, %34 : vector<4x16x1xf32>
      %36 = math.exp %35 : vector<4x16x1xf32>
      %37 = vector.broadcast %34 : vector<4x16x1xf32> to vector<4x16x16xf32>
      %38 = arith.subf %30, %37 : vector<4x16x16xf32>
      %39 = math.exp %38 : vector<4x16x16xf32>
      %c0_17 = arith.constant 0 : index
      %c0_18 = arith.constant 0 : index
      %c0_19 = arith.constant 0 : index
      %40 = vector.load %arg11[%c0_17, %c0_18, %c0_19] : memref<4x16x1xf32, #tpu.memory_space<vmem>>, vector<4x16x1xf32>
      %41 = arith.mulf %36, %40 : vector<4x16x1xf32>
      %cst_20 = arith.constant dense<0.000000e+00> : vector<4x16xf32>
      %42 = vector.multi_reduction <add>, %39, %cst_20 [2] : vector<4x16x16xf32> to vector<4x16xf32>
      %43 = vector.shape_cast %42 : vector<4x16xf32> to vector<4x16x1xf32>
      %44 = arith.addf %41, %43 : vector<4x16x1xf32>
      %c0_21 = arith.constant 0 : index
      %c0_22 = arith.constant 0 : index
      %c0_23 = arith.constant 0 : index
      %45 = vector.load %arg11[%c0_21, %c0_22, %c0_23] : memref<4x16x1xf32, #tpu.memory_space<vmem>>, vector<4x16x1xf32>
      tpu.vector_store %arg11[%c0_21, %c0_22, %c0_23], %44 {strides = array<i32>} : memref<4x16x1xf32, #tpu.memory_space<vmem>>, vector<4x16x1xf32>,
      %c0_24 = arith.constant 0 : index
      %c0_25 = arith.constant 0 : index
      %c0_26 = arith.constant 0 : index
      %46 = vector.load %arg12[%c0_24, %c0_25, %c0_26] : memref<4x16x8xf32, #tpu.memory_space<vmem>>, vector<4x16x8xf32>
      %47 = vector.broadcast %36 : vector<4x16x1xf32> to vector<4x16x8xf32>
      %48 = arith.mulf %47, %46 : vector<4x16x8xf32>
      %49 = arith.truncf %39 : vector<4x16x16xf32> to vector<4x16x16xbf16>
      "tpu.trace_start"() <{level = 10 : i32, message = "hqk,hkd->hqd"}> : () -> ()
      %cst_27 = arith.constant dense<0.000000e+00> : vector<4x16x8xf32>
      %50 = tpu.matmul %49, %20, %cst_27 {dimension_numbers = #tpu.dot_dimension_numbers<[2], [1], [1], [2], [0, 0, 0, 1, 1, 2], [0], [0]>} : vector<4x16x16xbf16>, vector<4x16x8xbf16>, vector<4x16x8xf32> -> vector<4x16x8xf32>
      "tpu.trace_stop"() : () -> ()
      %51 = arith.addf %48, %50 : vector<4x16x8xf32>
      %c0_28 = arith.constant 0 : index
      %c0_29 = arith.constant 0 : index
      %c0_30 = arith.constant 0 : index
      %52 = vector.load %arg12[%c0_28, %c0_29, %c0_30] : memref<4x16x8xf32, #tpu.memory_space<vmem>>, vector<4x16x8xf32>
      tpu.vector_store %arg12[%c0_28, %c0_29, %c0_30], %51 {strides = array<i32>} : memref<4x16x8xf32, #tpu.memory_space<vmem>>, vector<4x16x8xf32>,
      %c0_31 = arith.constant 0 : index
      %c0_32 = arith.constant 0 : index
      %c0_33 = arith.constant 0 : index
      %53 = vector.load %arg10[%c0_31, %c0_32, %c0_33] : memref<4x16x1xf32, #tpu.memory_space<vmem>>, vector<4x16x1xf32>
      tpu.vector_store %arg10[%c0_31, %c0_32, %c0_33], %34 {strides = array<i32>} : memref<4x16x1xf32, #tpu.memory_space<vmem>>, vector<4x16x1xf32>,
    } else {
    }
    %c0_i32_2 = arith.constant 0 : i32
    %8 = arith.cmpi eq, %arg1, %c0_i32_2 : i32
    %9 = arith.extui %8 : i1 to i32
    %c0_i32_3 = arith.constant 0 : i32
    %10 = arith.cmpi ne, %9, %c0_i32_3 : i32
    scf.if %10 {
      %c0 = arith.constant 0 : index
      %c0_4 = arith.constant 0 : index
      %c0_5 = arith.constant 0 : index
      %11 = vector.load %arg11[%c0, %c0_4, %c0_5] : memref<4x16x1xf32, #tpu.memory_space<vmem>>, vector<4x16x1xf32>
      %cst = arith.constant 0.000000e+00 : f32
      %12 = vector.broadcast %cst : f32 to vector<4x16x1xf32>
      %13 = arith.cmpf ogt, %11, %12 : vector<4x16x1xf32>
      %cst_6 = arith.constant 1.000000e+00 : f32
      %14 = vector.broadcast %cst_6 : f32 to vector<4x16x1xf32>
      %15 = arith.select %13, %11, %14 : vector<4x16x1xi1>, vector<4x16x1xf32>
      %16 = tpu.reciprocal %15 {approx = true} : vector<4x16x1xf32> -> vector<4x16x1xf32>
      %c0_7 = arith.constant 0 : index
      %c0_8 = arith.constant 0 : index
      %c0_9 = arith.constant 0 : index
      %17 = vector.load %arg12[%c0_7, %c0_8, %c0_9] : memref<4x16x8xf32, #tpu.memory_space<vmem>>, vector<4x16x8xf32>
      %18 = vector.broadcast %16 : vector<4x16x1xf32> to vector<4x16x8xf32>
      %19 = arith.mulf %17, %18 : vector<4x16x8xf32>
      %20 = vector.extract_strided_slice %19 {offsets = [0, 0, 0], sizes = [1, 16, 8], strides = [1, 1, 1]} : vector<4x16x8xf32> to vector<1x16x8xf32>
      %21 = vector.shape_cast %20 : vector<1x16x8xf32> to vector<16x8xf32>
      %22 = vector.extract_strided_slice %19 {offsets = [1, 0, 0], sizes = [1, 16, 8], strides = [1, 1, 1]} : vector<4x16x8xf32> to vector<1x16x8xf32>
      %23 = vector.shape_cast %22 : vector<1x16x8xf32> to vector<16x8xf32>
      %24 = vector.extract_strided_slice %19 {offsets = [2, 0, 0], sizes = [1, 16, 8], strides = [1, 1, 1]} : vector<4x16x8xf32> to vector<1x16x8xf32>
      %25 = vector.shape_cast %24 : vector<1x16x8xf32> to vector<16x8xf32>
      %26 = vector.extract_strided_slice %19 {offsets = [3, 0, 0], sizes = [1, 16, 8], strides = [1, 1, 1]} : vector<4x16x8xf32> to vector<1x16x8xf32>
      %27 = vector.shape_cast %26 : vector<1x16x8xf32> to vector<16x8xf32>
      %28 = tpu.concatenate %21, %23, %25, %27 in 1 : vector<16x8xf32>, vector<16x8xf32>, vector<16x8xf32>, vector<16x8xf32> -> vector<16x32xf32>
      %c0_10 = arith.constant 0 : index
      %c0_11 = arith.constant 0 : index
      %29 = vector.load %arg8[%c0_10, %c0_11] : memref<16x32xbf16, #tpu.memory_space<vmem>>, vector<16x32xbf16>
      %30 = arith.extf %29 : vector<16x32xbf16> to vector<16x32xf32>
      %31 = arith.addf %28, %30 : vector<16x32xf32>
      %cst_12 = arith.constant 0.000000e+00 : f32
      %32 = vector.broadcast %cst_12 : f32 to vector<16x32xf32>
      %33 = arith.maximumf %31, %32 : vector<16x32xf32>
      %34 = arith.truncf %33 : vector<16x32xf32> to vector<16x32xbf16>
      %c0_13 = arith.constant 0 : index
      %c0_14 = arith.constant 0 : index
      %35 = vector.load %arg9[%c0_13, %c0_14] : memref<16x32xbf16, #tpu.memory_space<vmem>>, vector<16x32xbf16>
      tpu.vector_store %arg9[%c0_13, %c0_14], %34 {strides = array<i32>} : memref<16x32xbf16, #tpu.memory_space<vmem>>, vector<16x32xbf16>,
    } else {
    }
    return
  }
  func.func @transform_0(%arg0: i32, %arg1: i32, %arg2: memref<1xi32, #tpu.memory_space<smem>>, %arg3: memref<1xi32, #tpu.memory_space<smem>>) -> (i32, i32, i32) {
    %c0_i32 = arith.constant 0 : i32
    %c0_i32_0 = arith.constant 0 : i32
    %c0_i32_1 = arith.constant 0 : i32
    return %c0_i32, %arg0, %c0_i32_0 : i32, i32, i32
  }
  func.func @transform_1(%arg0: i32, %arg1: i32, %arg2: memref<1xi32, #tpu.memory_space<smem>>, %arg3: memref<1xi32, #tpu.memory_space<smem>>) -> (i32, i32, i32) {
    %c0_i32 = arith.constant 0 : i32
    %c0_i32_0 = arith.constant 0 : i32
    %c0_i32_1 = arith.constant 0 : i32
    %c0_i32_2 = arith.constant 0 : i32
    return %c0_i32, %c0_i32_0, %c0_i32_1 : i32, i32, i32
  }
  func.func @transform_2(%arg0: i32, %arg1: i32, %arg2: memref<1xi32, #tpu.memory_space<smem>>, %arg3: memref<1xi32, #tpu.memory_space<smem>>) -> (i32, i32, i32) {
    %c0_i32 = arith.constant 0 : i32
    %c0_i32_0 = arith.constant 0 : i32
    %c0_i32_1 = arith.constant 0 : i32
    %c0_i32_2 = arith.constant 0 : i32
    return %c0_i32, %c0_i32_0, %c0_i32_1 : i32, i32, i32
  }
  func.func @transform_3(%arg0: i32, %arg1: i32, %arg2: memref<1xi32, #tpu.memory_space<smem>>, %arg3: memref<1xi32, #tpu.memory_space<smem>>) -> (i32, i32) {
    %c1_i32 = arith.constant 1 : i32
    %0 = arith.muli %arg0, %c1_i32 : i32
    %1 = arith.addi %0, %arg1 : i32
    %2 = arith.index_cast %1 : i32 to index
    %3 = memref.load %arg3[%2] : memref<1xi32, #tpu.memory_space<smem>>
    %c0_i32 = arith.constant 0 : i32
    return %arg0, %3 : i32, i32
  }
  func.func @transform_4(%arg0: i32, %arg1: i32, %arg2: memref<1xi32, #tpu.memory_space<smem>>, %arg3: memref<1xi32, #tpu.memory_space<smem>>) -> (i32, i32) {
    %c0_i32 = arith.constant 0 : i32
    %c0_i32_0 = arith.constant 0 : i32
    return %arg0, %c0_i32 : i32, i32
  }
  func.func @transform_5(%arg0: i32, %arg1: i32, %arg2: memref<1xi32, #tpu.memory_space<smem>>, %arg3: memref<1xi32, #tpu.memory_space<smem>>) -> (i32, i32) {
    %c0_i32 = arith.constant 0 : i32
    %c0_i32_0 = arith.constant 0 : i32
    return %arg0, %c0_i32 : i32, i32
  }
}

module attributes {stable_mosaic.version = 11 : i64} {
  func.func @_pool_fc_kernel(%arg0: memref<2x16xf32, #tpu.memory_space<vmem>>, %arg1: memref<16x32xbf16, #tpu.memory_space<vmem>>, %arg2: memref<32x4xf32, #tpu.memory_space<vmem>>, %arg3: memref<1x4xf32, #tpu.memory_space<vmem>>, %arg4: memref<2x4xf32, #tpu.memory_space<vmem>>) attributes {dimension_semantics = [], scalar_prefetch = 0 : i64, scratch_operands = 0 : i64, tpu.core_type = #tpu.core_type<tc>} {
    %c0 = arith.constant 0 : index
    %c0_0 = arith.constant 0 : index
    %0 = vector.load %arg0[%c0, %c0_0] : memref<2x16xf32, #tpu.memory_space<vmem>>, vector<2x16xf32>
    %c0_1 = arith.constant 0 : index
    %c0_2 = arith.constant 0 : index
    %1 = vector.load %arg1[%c0_1, %c0_2] : memref<16x32xbf16, #tpu.memory_space<vmem>>, vector<16x32xbf16>
    %2 = arith.extf %1 : vector<16x32xbf16> to vector<16x32xf32>
    %cst = arith.constant dense<0.000000e+00> : vector<2x32xf32>
    %3 = tpu.matmul %0, %2, %cst {dimension_numbers = #tpu.dot_dimension_numbers<[1], [0], [0], [1], [0, 0, 1, 1], [], []>} : vector<2x16xf32>, vector<16x32xf32>, vector<2x32xf32> -> vector<2x32xf32>
    %c0_3 = arith.constant 0 : index
    %c0_4 = arith.constant 0 : index
    %4 = vector.load %arg2[%c0_3, %c0_4] : memref<32x4xf32, #tpu.memory_space<vmem>>, vector<32x4xf32>
    %cst_5 = arith.constant dense<0.000000e+00> : vector<2x4xf32>
    %5 = tpu.matmul %3, %4, %cst_5 {dimension_numbers = #tpu.dot_dimension_numbers<[1], [0], [0], [1], [0, 0, 1, 1], [], []>} : vector<2x32xf32>, vector<32x4xf32>, vector<2x4xf32> -> vector<2x4xf32>
    %c0_6 = arith.constant 0 : index
    %c0_7 = arith.constant 0 : index
    %6 = vector.load %arg3[%c0_6, %c0_7] : memref<1x4xf32, #tpu.memory_space<vmem>>, vector<1x4xf32>
    %7 = vector.broadcast %6 : vector<1x4xf32> to vector<2x4xf32>
    %8 = arith.addf %5, %7 : vector<2x4xf32>
    %c0_8 = arith.constant 0 : index
    %c0_9 = arith.constant 0 : index
    %9 = vector.load %arg4[%c0_8, %c0_9] : memref<2x4xf32, #tpu.memory_space<vmem>>, vector<2x4xf32>
    tpu.vector_store %arg4[%c0_8, %c0_9], %8 {strides = array<i32>} : memref<2x4xf32, #tpu.memory_space<vmem>>, vector<2x4xf32>,
    return
  }
}

</mosaic_0001>

<llo_original>
// kernel: graph_transformer_forward.7
$region0: #{graph_transformer_forward.7}
  #allocation0 [shape = 'u32[]', space=smem, size = 0x4, offset = 0x4, fixed_abs, tag = 'smem constant byte address 0x4 - core index']
  #allocation1 [shape = 'u32[72,128]{1,0:T(1,128)}', space=vmem, size = 0x9000, scoped, tag = 'internal scratch']
  %s0 = inlined_call_operand.vmem [shape: bf16[16,32], index: 0, kind: input, shape index: {}]
  %s1 = inlined_call_operand.vmem [shape: bf16[32,128], index: 1, kind: input, shape index: {}]
  %s2 = inlined_call_operand.vmem [shape: bf16[1,128], index: 2, kind: input, shape index: {}]
  %s3 = inlined_call_operand.vmem [shape: bf16[4,16,8], index: 3, kind: output, shape index: {0}]
  %s4 = inlined_call_operand.vmem [shape: bf16[4,16,8], index: 4, kind: output, shape index: {1}]
  %s5 = inlined_call_operand.vmem [shape: bf16[4,16,8], index: 5, kind: output, shape index: {2}]
  %s6 = inlined_call_operand.vmem [shape: bf16[16,32], index: 6, kind: output, shape index: {3}]
  %7 = xla_tuple %s3, %s4, %s5, %s6
  %s8 = sld [smem:[#allocation0]]
  $region46: #{graph_transformer_forward.7} parent=0
    _
  %s10 = ssub.s32 1, %s8
  %s11 = scalar_select 0, %s10, %s8
  // Predicated region
  $region2: #{graph_transformer_forward.7} parent=0 // pred_check
    _
  $region3: #{graph_transformer_forward.7} parent=0 // pred_check_branch
    %13 = sbr.rel (0) target = $region5
  $region4: #{graph_transformer_forward.7} parent=0 // pred_region
    _
  $region5: #{graph_transformer_forward.7} parent=0 // pred_fallthru
    _
  // Predicated region
  $region6: #{graph_transformer_forward.7} parent=0 // pred_check
    _
  $region7: #{graph_transformer_forward.7} parent=0 // pred_check_branch
    %15 = sbr.rel (0) target = $region9
  $region8: #{graph_transformer_forward.7} parent=0 // pred_region
    _
  $region9: #{graph_transformer_forward.7} parent=0 // pred_fallthru
    _
  // Predicated region
  $region10: #{graph_transformer_forward.7} parent=0 // pred_check
    _
  $region11: #{graph_transformer_forward.7} parent=0 // pred_check_branch
    %17 = sbr.rel (0) target = $region13
  $region12: #{graph_transformer_forward.7} parent=0 // pred_region
    _
  $region13: #{graph_transformer_forward.7} parent=0 // pred_fallthru
    _
  %v19 = vld [vmem:[%s0] sm:$0xf]
  %v20 = vld [vmem:[%s0 + $0x4] sm:$0xf]
  %v21 = vld [vmem:[%s1] sm:$0xf]
  %v22 = vld [vmem:[%s1 + $0x4] sm:$0xf]
  %v23 = vld [vmem:[%s1 + $0x8] sm:$0xf]
  %v24 = vld [vmem:[%s1 + $0xc] sm:$0xf]
  %v25 = vld [vmem:[%s2] sm:$0x1]
  %v26 = vunpack.c.l.bf16 %v25
  %v27 = vperm.slane %v26, 0
  %v30 = vunpack.c.l.b16 %v19
  %v31 = vunpack.c.l.b16 %v20
  %v32 = vpack.c.b16 %v31, %v30
  %v37 = vunpack.c.l.b16 %v21
  %v38 = vunpack.c.l.b16 %v22
  %v39 = vunpack.c.l.b16 %v23
  %v40 = vunpack.c.l.b16 %v24
  %v41 = vpack.c.b16 %v38, %v37
  %v42 = vpack.c.b16 %v40, %v39
  %vm45 = vcmask 261120
  %v47 = vsel %vm45, %v32, 0
  %49 = vmatpush.bf16.msra.mxu0 0
  %50 = vmatpush.bf16.msra.mxu0 0
  %51 = vmatpush.bf16.msra.mxu0 0
  %52 = vmatpush.bf16.msra.mxu0 0
  %53 = vmatpush.bf16.msra.mxu0 0
  %54 = vmatpush.bf16.msra.mxu0 0
  %55 = vmatpush.bf16.msra.mxu0 %v42
  %56 = vmatpush.bf16.msra.mxu0 %v41
  %57 = vmatmul.bf16.gmra.mxu0 %v47
  %v58 = vpop.f32.mrf.mxu0
  %v59 = vadd.f32 %v27, %v58
  %v60 = vpop.f32.mrf.mxu0
  %v61 = vadd.f32 %v27, %v60
  %62 = vdwg.mxu0
  %v63 = vpack.c.bf16 %v59, %v59
  %v64 = vpack.c.bf16 %v61, %v61
  %vm65 = vcmask 60416
  %66 = vst.msk [vmem:[%s3] sm:$0xf] %vm65, %v63
  %67 = vst.msk [vmem:[%s3 + $0x4] sm:$0xf] %vm65, %v64
  %70 = vrot.lane.b32.xlu0 %v63, 96
  %v71 = vpop.permute.xlu0 %70
  %72 = vrot.lane.b32.xlu0 %v64, 96
  %v73 = vpop.permute.xlu0 %72
  %76 = vst.msk [vmem:[%s4] sm:$0xf] %vm65, %v71
  %77 = vst.msk [vmem:[%s4 + $0x4] sm:$0xf] %vm65, %v73
  %78 = vrot.lane.b32.xlu0 %v63, 64
  %v79 = vpop.permute.xlu0 %78
  %80 = vrot.lane.b32.xlu0 %v64, 64
  %v81 = vpop.permute.xlu0 %80
  %84 = vst.msk [vmem:[%s5] sm:$0xf] %vm65, %v79
  %85 = vst.msk [vmem:[%s5 + $0x4] sm:$0xf] %vm65, %v81
  %86 = vrot.lane.b32.xlu0 %v63, 120
  %v87 = vpop.permute.xlu0 %86
  %88 = vrot.lane.b32.xlu0 %v64, 120
  %v89 = vpop.permute.xlu0 %88
  %s92 = scalar_lea.vmem %s3, 8
  %93 = vst.msk [vmem:[%s92] sm:$0xf] %vm65, %v87
  %94 = vst.msk [vmem:[%s92 + $0x4] sm:$0xf] %vm65, %v89
  %95 = vrot.lane.b32.xlu0 %v63, 88
  %v96 = vpop.permute.xlu0 %95
  %97 = vrot.lane.b32.xlu0 %v64, 88
  %v98 = vpop.permute.xlu0 %97
  %s101 = scalar_lea.vmem %s4, 8
  %102 = vst.msk [vmem:[%s101] sm:$0xf] %vm65, %v96
  %103 = vst.msk [vmem:[%s101 + $0x4] sm:$0xf] %vm65, %v98
  %104 = vrot.lane.b32.xlu0 %v63, 56
  %v105 = vpop.permute.xlu0 %104
  %106 = vrot.lane.b32.xlu0 %v64, 56
  %v107 = vpop.permute.xlu0 %106
  %s110 = scalar_lea.vmem %s5, 8
  %111 = vst.msk [vmem:[%s110] sm:$0xf] %vm65, %v105
  %112 = vst.msk [vmem:[%s110 + $0x4] sm:$0xf] %vm65, %v107
  %113 = vrot.lane.b32.xlu0 %v63, 112
  %v114 = vpop.permute.xlu0 %113
  %115 = vrot.lane.b32.xlu0 %v64, 112
  %v116 = vpop.permute.xlu0 %115
  %s119 = scalar_lea.vmem %s3, 16
  %120 = vst.msk [vmem:[%s119] sm:$0xf] %vm65, %v114
  %121 = vst.msk [vmem:[%s119 + $0x4] sm:$0xf] %vm65, %v116
  %122 = vrot.lane.b32.xlu0 %v63, 80
  %v123 = vpop.permute.xlu0 %122
  %124 = vrot.lane.b32.xlu0 %v64, 80
  %v125 = vpop.permute.xlu0 %124
  %s128 = scalar_lea.vmem %s4, 16
  %129 = vst.msk [vmem:[%s128] sm:$0xf] %vm65, %v123
  %130 = vst.msk [vmem:[%s128 + $0x4] sm:$0xf] %vm65, %v125
  %131 = vrot.lane.b32.xlu0 %v63, 48
  %v132 = vpop.permute.xlu0 %131
  %133 = vrot.lane.b32.xlu0 %v64, 48
  %v134 = vpop.permute.xlu0 %133
  %s137 = scalar_lea.vmem %s5, 16
  %138 = vst.msk [vmem:[%s137] sm:$0xf] %vm65, %v132
  %139 = vst.msk [vmem:[%s137 + $0x4] sm:$0xf] %vm65, %v134
  %140 = vrot.lane.b32.xlu0 %v63, 104
  %v141 = vpop.permute.xlu0 %140
  %142 = vrot.lane.b32.xlu0 %v64, 104
  %v143 = vpop.permute.xlu0 %142
  %s146 = scalar_lea.vmem %s3, 24
  %147 = vst.msk [vmem:[%s146] sm:$0xf] %vm65, %v141
  %148 = vst.msk [vmem:[%s146 + $0x4] sm:$0xf] %vm65, %v143
  %149 = vrot.lane.b32.xlu0 %v63, 72
  %v150 = vpop.permute.xlu0 %149
  %151 = vrot.lane.b32.xlu0 %v64, 72
  %v152 = vpop.permute.xlu0 %151
  %s155 = scalar_lea.vmem %s4, 24
  %156 = vst.msk [vmem:[%s155] sm:$0xf] %vm65, %v150
  %157 = vst.msk [vmem:[%s155 + $0x4] sm:$0xf] %vm65, %v152
  %158 = vrot.lane.b32.xlu0 %v63, 40
  %v159 = vpop.permute.xlu0 %158
  %160 = vrot.lane.b32.xlu0 %v64, 40
  %v161 = vpop.permute.xlu0 %160
  %s164 = scalar_lea.vmem %s5, 24
  %165 = vst.msk [vmem:[%s164] sm:$0xf] %vm65, %v159
  %166 = vst.msk [vmem:[%s164 + $0x4] sm:$0xf] %vm65, %v161
  %167 = vrot.lane.b32.xlu0 %v63, 32
  %v168 = vpop.permute.xlu0 %167
  %169 = vrot.lane.b32.xlu0 %v64, 32
  %v170 = vpop.permute.xlu0 %169
  %vm173 = vcmask 257024
  %174 = vst.msk [vmem:[%s6] sm:$0xf] %vm173, %v168
  %175 = vst.msk [vmem:[%s6 + $0x4] sm:$0xf] %vm173, %v170
  // Predicated region
  $region14: #{graph_transformer_forward.7} parent=0 // pred_check
    _
  $region15: #{graph_transformer_forward.7} parent=0 // pred_check_branch
    %177 = sbr.rel (0) target = $region17
  $region16: #{graph_transformer_forward.7} parent=0 // pred_region
    _
  $region17: #{graph_transformer_forward.7} parent=0 // pred_fallthru
    _
  // Predicated region
  $region18: #{graph_transformer_forward.7} parent=0 // pred_check
    _
  $region19: #{graph_transformer_forward.7} parent=0 // pred_check_branch
    %179 = sbr.rel (0) target = $region21
  $region20: #{graph_transformer_forward.7} parent=0 // pred_region
    _
  $region21: #{graph_transformer_forward.7} parent=0 // pred_fallthru
    _
  // Predicated region
  $region22: #{graph_transformer_forward.7} parent=0 // pred_check
    _
  $region23: #{graph_transformer_forward.7} parent=0 // pred_check_branch
    %181 = sbr.rel (0) target = $region25
  $region24: #{graph_transformer_forward.7} parent=0 // pred_region
    _
  $region25: #{graph_transformer_forward.7} parent=0 // pred_fallthru
    _
  // Predicated region
  $region26: #{graph_transformer_forward.7} parent=0 // pred_check
    _
  $region27: #{graph_transformer_forward.7} parent=0 // pred_check_branch
    %183 = sbr.rel (0) target = $region29
  $region28: #{graph_transformer_forward.7} parent=0 // pred_region
    _
  $region29: #{graph_transformer_forward.7} parent=0 // pred_fallthru
    _
  // Predicated region
  $region30: #{graph_transformer_forward.7} parent=0 // pred_check
    _
  $region31: #{graph_transformer_forward.7} parent=0 // pred_check_branch
    %185 = sbr.rel (0) target = $region33
  $region32: #{graph_transformer_forward.7} parent=0 // pred_region
    _
  $region33: #{graph_transformer_forward.7} parent=0 // pred_fallthru
    _
  // Predicated region
  $region34: #{graph_transformer_forward.7} parent=0 // pred_check
    _
  $region35: #{graph_transformer_forward.7} parent=0 // pred_check_branch
    %187 = sbr.rel (0) target = $region37
  $region36: #{graph_transformer_forward.7} parent=0 // pred_region
    _
  $region37: #{graph_transformer_forward.7} parent=0 // pred_fallthru
    _
  // Predicated region
  $region38: #{graph_transformer_forward.7} parent=0 // pred_check
    _
  $region39: #{graph_transformer_forward.7} parent=0 // pred_check_branch
    %189 = sbr.rel (0) target = $region41
  $region40: #{graph_transformer_forward.7} parent=0 // pred_region
    _
  $region41: #{graph_transformer_forward.7} parent=0 // pred_fallthru
    _
  // Predicated region
  $region42: #{graph_transformer_forward.7} parent=0 // pred_check
    _
  $region43: #{graph_transformer_forward.7} parent=0 // pred_check_branch
    %191 = sbr.rel (0) target = $region45
  $region44: #{graph_transformer_forward.7} parent=0 // pred_region
    _
  $region45: #{graph_transformer_forward.7} parent=0 // pred_fallthru
    _

// kernel: graph_transformer_forward.5
$region0: #{graph_transformer_forward.5}
  #allocation0 [shape = 'u32[]', space=smem, size = 0x4, offset = 0x4, fixed_abs, tag = 'smem constant byte address 0x4 - core index']
  #allocation1 [shape = 'u32[72,128]{1,0:T(1,128)}', space=vmem, size = 0x9000, scoped, tag = 'internal scratch']
  %s0 = inlined_call_operand.vmem [shape: bf16[16,8], index: 0, kind: input, shape index: {}]
  %s1 = inlined_call_operand.vmem [shape: bf16[8,128], index: 1, kind: input, shape index: {}]
  %s2 = inlined_call_operand.vmem [shape: bf16[1,128], index: 2, kind: input, shape index: {}]
  %s3 = inlined_call_operand.vmem [shape: bf16[4,16,8], index: 3, kind: output, shape index: {0}]
  %s4 = inlined_call_operand.vmem [shape: bf16[4,16,8], index: 4, kind: output, shape index: {1}]
  %s5 = inlined_call_operand.vmem [shape: bf16[4,16,8], index: 5, kind: output, shape index: {2}]
  %s6 = inlined_call_operand.vmem [shape: bf16[16,32], index: 6, kind: output, shape index: {3}]
  %7 = xla_tuple %s3, %s4, %s5, %s6
  %s8 = sld [smem:[#allocation0]]
  $region46: #{graph_transformer_forward.5} parent=0
    _
  %s10 = ssub.s32 1, %s8
  %s11 = scalar_select 0, %s10, %s8
  // Predicated region
  $region2: #{graph_transformer_forward.5} parent=0 // pred_check
    _
  $region3: #{graph_transformer_forward.5} parent=0 // pred_check_branch
    %13 = sbr.rel (0) target = $region5
  $region4: #{graph_transformer_forward.5} parent=0 // pred_region
    _
  $region5: #{graph_transformer_forward.5} parent=0 // pred_fallthru
    _
  // Predicated region
  $region6: #{graph_transformer_forward.5} parent=0 // pred_check
    _
  $region7: #{graph_transformer_forward.5} parent=0 // pred_check_branch
    %15 = sbr.rel (0) target = $region9
  $region8: #{graph_transformer_forward.5} parent=0 // pred_region
    _
  $region9: #{graph_transformer_forward.5} parent=0 // pred_fallthru
    _
  // Predicated region
  $region10: #{graph_transformer_forward.5} parent=0 // pred_check
    _
  $region11: #{graph_transformer_forward.5} parent=0 // pred_check_branch
    %17 = sbr.rel (0) target = $region13
  $region12: #{graph_transformer_forward.5} parent=0 // pred_region
    _
  $region13: #{graph_transformer_forward.5} parent=0 // pred_fallthru
    _
  %v19 = vld [vmem:[%s0] sm:$0xf]
  %v20 = vld [vmem:[%s0 + $0x4] sm:$0xf]
  %v21 = vld [vmem:[%s1] sm:$0xf]
  %v22 = vld [vmem:[%s2] sm:$0x1]
  %v23 = vunpack.c.l.bf16 %v22
  %v24 = vperm.slane %v23, 0
  %v27 = vunpack.c.l.b16 %v19
  %v28 = vunpack.c.l.b16 %v20
  %v29 = vpack.c.b16 %v28, %v27
  %vm30 = vcmask 64512
  %v32 = vsel %vm30, %v29, 0
  %vm34 = vcmask 1043456
  %v36 = vsel %vm34, %v21, 0
  %38 = vmatpush.bf16.msra.mxu0 0
  %39 = vmatpush.bf16.msra.mxu0 0
  %40 = vmatpush.bf16.msra.mxu0 0
  %41 = vmatpush.bf16.msra.mxu0 0
  %42 = vmatpush.bf16.msra.mxu0 0
  %43 = vmatpush.bf16.msra.mxu0 0
  %44 = vmatpush.bf16.msra.mxu0 0
  %45 = vmatpush.bf16.msra.mxu0 %v36
  %46 = vmatmul.bf16.gmra.mxu0 %v32
  %v47 = vpop.f32.mrf.mxu0
  %v48 = vadd.f32 %v24, %v47
  %v49 = vpop.f32.mrf.mxu0
  %v50 = vadd.f32 %v24, %v49
  %51 = vdwg.mxu0
  %v52 = vpack.c.bf16 %v48, %v48
  %v53 = vpack.c.bf16 %v50, %v50
  %vm54 = vcmask 60416
  %55 = vst.msk [vmem:[%s3] sm:$0xf] %vm54, %v52
  %56 = vst.msk [vmem:[%s3 + $0x4] sm:$0xf] %vm54, %v53
  %59 = vrot.lane.b32.xlu0 %v52, 96
  %v60 = vpop.permute.xlu0 %59
  %61 = vrot.lane.b32.xlu0 %v53, 96
  %v62 = vpop.permute.xlu0 %61
  %65 = vst.msk [vmem:[%s4] sm:$0xf] %vm54, %v60
  %66 = vst.msk [vmem:[%s4 + $0x4] sm:$0xf] %vm54, %v62
  %67 = vrot.lane.b32.xlu0 %v52, 64
  %v68 = vpop.permute.xlu0 %67
  %69 = vrot.lane.b32.xlu0 %v53, 64
  %v70 = vpop.permute.xlu0 %69
  %73 = vst.msk [vmem:[%s5] sm:$0xf] %vm54, %v68
  %74 = vst.msk [vmem:[%s5 + $0x4] sm:$0xf] %vm54, %v70
  %75 = vrot.lane.b32.xlu0 %v52, 120
  %v76 = vpop.permute.xlu0 %75
  %77 = vrot.lane.b32.xlu0 %v53, 120
  %v78 = vpop.permute.xlu0 %77
  %s81 = scalar_lea.vmem %s3, 8
  %82 = vst.msk [vmem:[%s81] sm:$0xf] %vm54, %v76
  %83 = vst.msk [vmem:[%s81 + $0x4] sm:$0xf] %vm54, %v78
  %84 = vrot.lane.b32.xlu0 %v52, 88
  %v85 = vpop.permute.xlu0 %84
  %86 = vrot.lane.b32.xlu0 %v53, 88
  %v87 = vpop.permute.xlu0 %86
  %s90 = scalar_lea.vmem %s4, 8
  %91 = vst.msk [vmem:[%s90] sm:$0xf] %vm54, %v85
  %92 = vst.msk [vmem:[%s90 + $0x4] sm:$0xf] %vm54, %v87
  %93 = vrot.lane.b32.xlu0 %v52, 56
  %v94 = vpop.permute.xlu0 %93
  %95 = vrot.lane.b32.xlu0 %v53, 56
  %v96 = vpop.permute.xlu0 %95
  %s99 = scalar_lea.vmem %s5, 8
  %100 = vst.msk [vmem:[%s99] sm:$0xf] %vm54, %v94
  %101 = vst.msk [vmem:[%s99 + $0x4] sm:$0xf] %vm54, %v96
  %102 = vrot.lane.b32.xlu0 %v52, 112
  %v103 = vpop.permute.xlu0 %102
  %104 = vrot.lane.b32.xlu0 %v53, 112
  %v105 = vpop.permute.xlu0 %104
  %s108 = scalar_lea.vmem %s3, 16
  %109 = vst.msk [vmem:[%s108] sm:$0xf] %vm54, %v103
  %110 = vst.msk [vmem:[%s108 + $0x4] sm:$0xf] %vm54, %v105
  %111 = vrot.lane.b32.xlu0 %v52, 80
  %v112 = vpop.permute.xlu0 %111
  %113 = vrot.lane.b32.xlu0 %v53, 80
  %v114 = vpop.permute.xlu0 %113
  %s117 = scalar_lea.vmem %s4, 16
  %118 = vst.msk [vmem:[%s117] sm:$0xf] %vm54, %v112
  %119 = vst.msk [vmem:[%s117 + $0x4] sm:$0xf] %vm54, %v114
  %120 = vrot.lane.b32.xlu0 %v52, 48
  %v121 = vpop.permute.xlu0 %120
  %122 = vrot.lane.b32.xlu0 %v53, 48
  %v123 = vpop.permute.xlu0 %122
  %s126 = scalar_lea.vmem %s5, 16
  %127 = vst.msk [vmem:[%s126] sm:$0xf] %vm54, %v121
  %128 = vst.msk [vmem:[%s126 + $0x4] sm:$0xf] %vm54, %v123
  %129 = vrot.lane.b32.xlu0 %v52, 104
  %v130 = vpop.permute.xlu0 %129
  %131 = vrot.lane.b32.xlu0 %v53, 104
  %v132 = vpop.permute.xlu0 %131
  %s135 = scalar_lea.vmem %s3, 24
  %136 = vst.msk [vmem:[%s135] sm:$0xf] %vm54, %v130
  %137 = vst.msk [vmem:[%s135 + $0x4] sm:$0xf] %vm54, %v132
  %138 = vrot.lane.b32.xlu0 %v52, 72
  %v139 = vpop.permute.xlu0 %138
  %140 = vrot.lane.b32.xlu0 %v53, 72
  %v141 = vpop.permute.xlu0 %140
  %s144 = scalar_lea.vmem %s4, 24
  %145 = vst.msk [vmem:[%s144] sm:$0xf] %vm54, %v139
  %146 = vst.msk [vmem:[%s144 + $0x4] sm:$0xf] %vm54, %v141
  %147 = vrot.lane.b32.xlu0 %v52, 40
  %v148 = vpop.permute.xlu0 %147
  %149 = vrot.lane.b32.xlu0 %v53, 40
  %v150 = vpop.permute.xlu0 %149
  %s153 = scalar_lea.vmem %s5, 24
  %154 = vst.msk [vmem:[%s153] sm:$0xf] %vm54, %v148
  %155 = vst.msk [vmem:[%s153 + $0x4] sm:$0xf] %vm54, %v150
  %156 = vrot.lane.b32.xlu0 %v52, 32
  %v157 = vpop.permute.xlu0 %156
  %158 = vrot.lane.b32.xlu0 %v53, 32
  %v159 = vpop.permute.xlu0 %158
  %vm162 = vcmask 257024
  %163 = vst.msk [vmem:[%s6] sm:$0xf] %vm162, %v157
  %164 = vst.msk [vmem:[%s6 + $0x4] sm:$0xf] %vm162, %v159
  // Predicated region
  $region14: #{graph_transformer_forward.5} parent=0 // pred_check
    _
  $region15: #{graph_transformer_forward.5} parent=0 // pred_check_branch
    %166 = sbr.rel (0) target = $region17
  $region16: #{graph_transformer_forward.5} parent=0 // pred_region
    _
  $region17: #{graph_transformer_forward.5} parent=0 // pred_fallthru
    _
  // Predicated region
  $region18: #{graph_transformer_forward.5} parent=0 // pred_check
    _
  $region19: #{graph_transformer_forward.5} parent=0 // pred_check_branch
    %168 = sbr.rel (0) target = $region21
  $region20: #{graph_transformer_forward.5} parent=0 // pred_region
    _
  $region21: #{graph_transformer_forward.5} parent=0 // pred_fallthru
    _
  // Predicated region
  $region22: #{graph_transformer_forward.5} parent=0 // pred_check
    _
  $region23: #{graph_transformer_forward.5} parent=0 // pred_check_branch
    %170 = sbr.rel (0) target = $region25
  $region24: #{graph_transformer_forward.5} parent=0 // pred_region
    _
  $region25: #{graph_transformer_forward.5} parent=0 // pred_fallthru
    _
  // Predicated region
  $region26: #{graph_transformer_forward.5} parent=0 // pred_check
    _
  $region27: #{graph_transformer_forward.5} parent=0 // pred_check_branch
    %172 = sbr.rel (0) target = $region29
  $region28: #{graph_transformer_forward.5} parent=0 // pred_region
    _
  $region29: #{graph_transformer_forward.5} parent=0 // pred_fallthru
    _
  // Predicated region
  $region30: #{graph_transformer_forward.5} parent=0 // pred_check
    _
  $region31: #{graph_transformer_forward.5} parent=0 // pred_check_branch
    %174 = sbr.rel (0) target = $region33
  $region32: #{graph_transformer_forward.5} parent=0 // pred_region
    _
  $region33: #{graph_transformer_forward.5} parent=0 // pred_fallthru
    _
  // Predicated region
  $region34: #{graph_transformer_forward.5} parent=0 // pred_check
    _
  $region35: #{graph_transformer_forward.5} parent=0 // pred_check_branch
    %176 = sbr.rel (0) target = $region37
  $region36: #{graph_transformer_forward.5} parent=0 // pred_region
    _
  $region37: #{graph_transformer_forward.5} parent=0 // pred_fallthru
    _
  // Predicated region
  $region38: #{graph_transformer_forward.5} parent=0 // pred_check
    _
  $region39: #{graph_transformer_forward.5} parent=0 // pred_check_branch
    %178 = sbr.rel (0) target = $region41
  $region40: #{graph_transformer_forward.5} parent=0 // pred_region
    _
  $region41: #{graph_transformer_forward.5} parent=0 // pred_fallthru
    _
  // Predicated region
  $region42: #{graph_transformer_forward.5} parent=0 // pred_check
    _
  $region43: #{graph_transformer_forward.5} parent=0 // pred_check_branch
    %180 = sbr.rel (0) target = $region45
  $region44: #{graph_transformer_forward.5} parent=0 // pred_region
    _
  $region45: #{graph_transformer_forward.5} parent=0 // pred_fallthru
    _

// kernel: graph_transformer_forward.6
$region0: #{graph_transformer_forward.6}
  #allocation0 [shape = 'u32[]', space=smem, size = 0x4, offset = 0x4, fixed_abs, tag = 'smem constant byte address 0x4 - core index']
  #allocation1 [shape = 'u32[72,128]{1,0:T(1,128)}', space=vmem, size = 0x9000, scoped, tag = 'internal scratch']
  #allocation2 [shape = 'f32[4,16,1]{2,1,0:T(8,128)}', space=vmem, size = 0x8000, scoped, tag = 'scratch operand']
  #allocation3 [shape = 'f32[4,16,1]{2,1,0:T(8,128)}', space=vmem, size = 0x8000, scoped, tag = 'scratch operand']
  #allocation4 [shape = 'f32[4,16,8]{2,1,0:T(8,128)}', space=vmem, size = 0x8000, scoped, tag = 'scratch operand']
  #allocation5 [shape = 's32[1]{0}', space=sflag, size = 0x4, scoped, tag = 'scoped memory for graph_transformer_forward.6']
  #allocation6 [shape = 's32[1]{0:T(128)S(6)}', space=smem, size = 0x200, scoped, tag = 'prefetched SMEM operand 0']
  #allocation7 [shape = 's32[1]{0:T(128)S(6)}', space=smem, size = 0x200, scoped, tag = 'prefetched SMEM operand 1']
  %s0 = inlined_call_operand.<no memory space> [shape: s32[1], index: 0, kind: input, shape index: {}]
  %s1 = inlined_call_operand.<no memory space> [shape: s32[1], index: 1, kind: input, shape index: {}]
  %s2 = inlined_call_operand.vmem [shape: bf16[4,16,8], index: 2, kind: input, shape index: {}]
  %s3 = inlined_call_operand.vmem [shape: bf16[4,16,8], index: 3, kind: input, shape index: {}]
  %s4 = inlined_call_operand.vmem [shape: bf16[4,16,8], index: 4, kind: input, shape index: {}]
  %s5 = inlined_call_operand.vmem [shape: s8[16,16], index: 5, kind: input, shape index: {}]
  %s6 = inlined_call_operand.vmem [shape: bf16[16,32], index: 6, kind: input, shape index: {}]
  %s7 = inlined_call_operand.vmem [shape: bf16[16,32], index: 7, kind: output, shape index: {}]
  %s8 = sld [smem:[#allocation0]]
  $region42: #{graph_transformer_forward.6} parent=0
    _
  %s10 = ssub.s32 1, %s8
  %s11 = scalar_select 0, %s10, %s8
  %12 = sst [smem:[#allocation6]] %s0
  %13 = sst [smem:[#allocation7]] %s1
  // Predicated region
  $region2: #{graph_transformer_forward.6} parent=0 // pred_check
    _
  $region3: #{graph_transformer_forward.6} parent=0 // pred_check_branch
    %15 = sbr.rel (0) target = $region5
  $region4: #{graph_transformer_forward.6} parent=0 // pred_region
    _
  $region5: #{graph_transformer_forward.6} parent=0 // pred_fallthru
    _
  // Predicated region
  $region6: #{graph_transformer_forward.6} parent=0 // pred_check
    _
  $region7: #{graph_transformer_forward.6} parent=0 // pred_check_branch
    %17 = sbr.rel (0) target = $region9
  $region8: #{graph_transformer_forward.6} parent=0 // pred_region
    _
  $region9: #{graph_transformer_forward.6} parent=0 // pred_fallthru
    _
  // Predicated region
  $region10: #{graph_transformer_forward.6} parent=0 // pred_check
    _
  $region11: #{graph_transformer_forward.6} parent=0 // pred_check_branch
    %19 = sbr.rel (0) target = $region13
  $region12: #{graph_transformer_forward.6} parent=0 // pred_region
    _
  $region13: #{graph_transformer_forward.6} parent=0 // pred_fallthru
    _
  // Predicated region
  $region14: #{graph_transformer_forward.6} parent=0 // pred_check
    _
  $region15: #{graph_transformer_forward.6} parent=0 // pred_check_branch
    %21 = sbr.rel (0) target = $region17
  $region16: #{graph_transformer_forward.6} parent=0 // pred_region
    %s22 = sadd.s32 0, 0
    %s23 = sld [smem:[#allocation7 + %s22]]
    %p24 = scmp.lt.s32.totalorder %s23, 0
    %s25 = scalar_select %p24, %s23, 0
    %s26 = smul.addr %s25, 2
    %s27 = scalar_lea.vmem %s5, %s26
    %s28 = sadd.s32 0, 0
    %s29 = sld [smem:[#allocation7 + %s28]]
  $region17: #{graph_transformer_forward.6} parent=0 // pred_fallthru
    _
  // Predicated region
  $region18: #{graph_transformer_forward.6} parent=0 // pred_check
    _
  $region19: #{graph_transformer_forward.6} parent=0 // pred_check_branch
    %31 = sbr.rel (0) target = $region21
  $region20: #{graph_transformer_forward.6} parent=0 // pred_region
    _
  $region21: #{graph_transformer_forward.6} parent=0 // pred_fallthru
    _
  %s32 = sadd.s32 0, 0
  %s33 = sld [smem:[#allocation7 + %s32]]
  %p34 = scmp.lt.s32.totalorder %s33, 0
  %s35 = scalar_select %p34, %s33, 0
  %s36 = smul.addr %s35, 2
  %s37 = scalar_lea.vmem %s5, %s36
  %s38 = sadd.s32 0, 0
  %s39 = sld [smem:[#allocation7 + %s38]]
  %p40 = scmp.lt.s32.totalorder %s39, 0
  %s41 = scalar_select %p40, %s39, 0
  %s42 = smul.addr %s41, 2
  %s43 = scalar_lea.vmem %s5, %s42
  %s44 = sadd.s32 0, 0
  %s45 = sld [smem:[#allocation7 + %s44]]
  %p49 = scmp.eq.s32.totalorder 0, 0
  // Predicated region
  $region22: #{graph_transformer_forward.6} parent=0 // pred_check
    %p50 = pneg %p49
  $region23: #{graph_transformer_forward.6} parent=0 // pred_check_branch
    %52 = sbr.rel (%p50) target = $region25
  $region24: #{graph_transformer_forward.6} parent=0 // pred_region
    %vm53 = vcmask 7168
    %54 = vst.msk [vmem:[#allocation2] sm:$0xff] %vm53, -1e+20
    %55 = vst.msk [vmem:[#allocation2 + $0x8] sm:$0xff] %vm53, -1e+20
    %56 = vst.msk [vmem:[#allocation2 + $0x10] sm:$0xff] %vm53, -1e+20
    %57 = vst.msk [vmem:[#allocation2 + $0x18] sm:$0xff] %vm53, -1e+20
    %58 = vst.msk [vmem:[#allocation2 + $0x20] sm:$0xff] %vm53, -1e+20
    %59 = vst.msk [vmem:[#allocation2 + $0x28] sm:$0xff] %vm53, -1e+20
    %60 = vst.msk [vmem:[#allocation2 + $0x30] sm:$0xff] %vm53, -1e+20
    %61 = vst.msk [vmem:[#allocation2 + $0x38] sm:$0xff] %vm53, -1e+20
    %62 = vst.msk [vmem:[#allocation3] sm:$0xff] %vm53, 0.0
    %63 = vst.msk [vmem:[#allocation3 + $0x8] sm:$0xff] %vm53, 0.0
    %64 = vst.msk [vmem:[#allocation3 + $0x10] sm:$0xff] %vm53, 0.0
    %65 = vst.msk [vmem:[#allocation3 + $0x18] sm:$0xff] %vm53, 0.0
    %66 = vst.msk [vmem:[#allocation3 + $0x20] sm:$0xff] %vm53, 0.0
    %67 = vst.msk [vmem:[#allocation3 + $0x28] sm:$0xff] %vm53, 0.0
    %68 = vst.msk [vmem:[#allocation3 + $0x30] sm:$0xff] %vm53, 0.0
    %69 = vst.msk [vmem:[#allocation3 + $0x38] sm:$0xff] %vm53, 0.0
    %vm70 = vcmask 64512
    %71 = vst.msk [vmem:[#allocation4] sm:$0xff] %vm70, 0.0
    %72 = vst.msk [vmem:[#allocation4 + $0x8] sm:$0xff] %vm70, 0.0
    %73 = vst.msk [vmem:[#allocation4 + $0x10] sm:$0xff] %vm70, 0.0
    %74 = vst.msk [vmem:[#allocation4 + $0x18] sm:$0xff] %vm70, 0.0
    %75 = vst.msk [vmem:[#allocation4 + $0x20] sm:$0xff] %vm70, 0.0
    %76 = vst.msk [vmem:[#allocation4 + $0x28] sm:$0xff] %vm70, 0.0
    %77 = vst.msk [vmem:[#allocation4 + $0x30] sm:$0xff] %vm70, 0.0
    %78 = vst.msk [vmem:[#allocation4 + $0x38] sm:$0xff] %vm70, 0.0
  $region25: #{graph_transformer_forward.6} parent=0 // pred_fallthru
    _
  %s79 = sld [smem:[#allocation6]]
  %p80 = scmp.lt.s32.totalorder 0, %s79
  // Predicated region
  $region26: #{graph_transformer_forward.6} parent=0 // pred_check
    %p81 = pneg %p80
  $region27: #{graph_transformer_forward.6} parent=0 // pred_check_branch
    %83 = sbr.rel (%p81) target = $region29
  $region28: #{graph_transformer_forward.6} parent=0 // pred_region
    %s84 = sadd.s32 0, 0
    %s85 = sld [smem:[#allocation7 + %s84]]
    %s86 = smul.u32 %s85, 16
    %s87 = sshra.s32 %s86, 3
    %s88 = sand.u32 %s86, 7
    %s89 = smul.addr %s87, 4
    %s90 = scalar_lea.vmem %s3, %s89
    %v91 = vld [vmem:[%s90] sm:$0xf]
    %v92 = vld [vmem:[%s90 + $0x4] sm:$0xf]
    %v93 = vld [vmem:[%s90 + $0x8] sm:$0xf]
    %v94 = vld [vmem:[%s90 + $0xc] sm:$0xf]
    %v95 = vld [vmem:[%s90 + $0x10] sm:$0xf]
    %v96 = vld [vmem:[%s90 + $0x14] sm:$0xf]
    %v97 = vld [vmem:[%s90 + $0x18] sm:$0xf]
    %v98 = vld [vmem:[%s90 + $0x1c] sm:$0xf]
    %s99 = smul.addr %s87, 4
    %s100 = scalar_lea.vmem %s4, %s99
    %v101 = vld [vmem:[%s100] sm:$0xf]
    %v102 = vld [vmem:[%s100 + $0x4] sm:$0xf]
    %v103 = vld [vmem:[%s100 + $0x8] sm:$0xf]
    %v104 = vld [vmem:[%s100 + $0xc] sm:$0xf]
    %v105 = vld [vmem:[%s100 + $0x10] sm:$0xf]
    %v106 = vld [vmem:[%s100 + $0x14] sm:$0xf]
    %v107 = vld [vmem:[%s100 + $0x18] sm:$0xf]
    %v108 = vld [vmem:[%s100 + $0x1c] sm:$0xf]
    %v109 = vld [vmem:[%s2] sm:$0xf]
    %v110 = vld [vmem:[%s2 + $0x4] sm:$0xf]
    %v111 = vld [vmem:[%s2 + $0x8] sm:$0xf]
    %v112 = vld [vmem:[%s2 + $0xc] sm:$0xf]
    %v113 = vld [vmem:[%s2 + $0x10] sm:$0xf]
    %v114 = vld [vmem:[%s2 + $0x14] sm:$0xf]
    %v115 = vld [vmem:[%s2 + $0x18] sm:$0xf]
    %v116 = vld [vmem:[%s2 + $0x1c] sm:$0xf]
    %v119 = vunpack.c.l.b16 %v109
    %v120 = vunpack.c.l.b16 %v110
    %v121 = vpack.c.b16 %v120, %v119
    %v124 = vunpack.c.l.b16 %v91
    %v125 = vunpack.c.l.b16 %v92
    %v126 = vpack.c.b16 %v125, %v124
    %vm127 = vcmask 64512
    %v129 = vsel %vm127, %v121, 0
    %v132 = vsel %vm127, %v126, 0
    %134 = vmatpush.bf16.xpose.msra.mxu0 0
    %135 = vmatpush.bf16.xpose.msra.mxu0 0
    %136 = vmatpush.bf16.xpose.msra.mxu0 0
    %137 = vmatpush.bf16.xpose.msra.mxu0 0
    %138 = vmatpush.bf16.xpose.msra.mxu0 0
    %139 = vmatpush.bf16.xpose.msra.mxu0 0
    %140 = vmatpush.bf16.xpose.msra.mxu0 0
    %141 = vmatpush.bf16.xpose.msra.mxu0 %v132
    %142 = vmatmul.bf16.gmra.mxu0 %v129
    %v143 = vpop.f32.mrf.mxu0
    %v144 = vadd.f32 0.0, %v143
    %v145 = vpop.f32.mrf.mxu0
    %v146 = vadd.f32 0.0, %v145
    %147 = vdwg.mxu0
    %v150 = vunpack.c.l.b16 %v111
    %v151 = vunpack.c.l.b16 %v112
    %v152 = vpack.c.b16 %v151, %v150
    %v155 = vunpack.c.l.b16 %v93
    %v156 = vunpack.c.l.b16 %v94
    %v157 = vpack.c.b16 %v156, %v155
    %v159 = vsel %vm127, %v152, 0
    %v162 = vsel %vm127, %v157, 0
    %164 = vmatpush.bf16.xpose.msra.mxu0 0
    %165 = vmatpush.bf16.xpose.msra.mxu0 0
    %166 = vmatpush.bf16.xpose.msra.mxu0 0
    %167 = vmatpush.bf16.xpose.msra.mxu0 0
    %168 = vmatpush.bf16.xpose.msra.mxu0 0
    %169 = vmatpush.bf16.xpose.msra.mxu0 0
    %170 = vmatpush.bf16.xpose.msra.mxu0 0
    %171 = vmatpush.bf16.xpose.msra.mxu0 %v162
    %172 = vmatmul.bf16.gmra.mxu0 %v159
    %v173 = vpop.f32.mrf.mxu0
    %v174 = vadd.f32 0.0, %v173
    %v175 = vpop.f32.mrf.mxu0
    %v176 = vadd.f32 0.0, %v175
    %177 = vdwg.mxu0
    %v180 = vunpack.c.l.b16 %v113
    %v181 = vunpack.c.l.b16 %v114
    %v182 = vpack.c.b16 %v181, %v180
    %v185 = vunpack.c.l.b16 %v95
    %v186 = vunpack.c.l.b16 %v96
    %v187 = vpack.c.b16 %v186, %v185
    %v189 = vsel %vm127, %v182, 0
    %v192 = vsel %vm127, %v187, 0
    %194 = vmatpush.bf16.xpose.msra.mxu0 0
    %195 = vmatpush.bf16.xpose.msra.mxu0 0
    %196 = vmatpush.bf16.xpose.msra.mxu0 0
    %197 = vmatpush.bf16.xpose.msra.mxu0 0
    %198 = vmatpush.bf16.xpose.msra.mxu0 0
    %199 = vmatpush.bf16.xpose.msra.mxu0 0
    %200 = vmatpush.bf16.xpose.msra.mxu0 0
    %201 = vmatpush.bf16.xpose.msra.mxu0 %v192
    %202 = vmatmul.bf16.gmra.mxu0 %v189
    %v203 = vpop.f32.mrf.mxu0
    %v204 = vadd.f32 0.0, %v203
    %v205 = vpop.f32.mrf.mxu0
    %v206 = vadd.f32 0.0, %v205
    %207 = vdwg.mxu0
    %v210 = vunpack.c.l.b16 %v115
    %v211 = vunpack.c.l.b16 %v116
    %v212 = vpack.c.b16 %v211, %v210
    %v215 = vunpack.c.l.b16 %v97
    %v216 = vunpack.c.l.b16 %v98
    %v217 = vpack.c.b16 %v216, %v215
    %v219 = vsel %vm127, %v212, 0
    %v222 = vsel %vm127, %v217, 0
    %224 = vmatpush.bf16.xpose.msra.mxu0 0
    %225 = vmatpush.bf16.xpose.msra.mxu0 0
    %226 = vmatpush.bf16.xpose.msra.mxu0 0
    %227 = vmatpush.bf16.xpose.msra.mxu0 0
    %228 = vmatpush.bf16.xpose.msra.mxu0 0
    %229 = vmatpush.bf16.xpose.msra.mxu0 0
    %230 = vmatpush.bf16.xpose.msra.mxu0 0
    %231 = vmatpush.bf16.xpose.msra.mxu0 %v222
    %232 = vmatmul.bf16.gmra.mxu0 %v219
    %v233 = vpop.f32.mrf.mxu0
    %v234 = vadd.f32 0.0, %v233
    %v235 = vpop.f32.mrf.mxu0
    %v236 = vadd.f32 0.0, %v235
    %237 = vdwg.mxu0
    %v238 = vld [vmem:[%s43] sm:$0x3]
    %v239 = vld [vmem:[%s43 + $0x2] sm:$0x3]
    %vm240 = vnez %v238
    %vm241 = vnez %v239
    %v242 = vsel %vm240, 16843009, 0
    %v243 = vsel %vm241, 16843009, 0
    %v244 = vunpack.c.0.s8 %v242
    %v245 = vunpack.c.0.s8 %v243
    %vm246 = vcmp.ne.s32.totalorder %v244, 0
    %vm247 = vcmp.ne.s32.totalorder %v245, 0
    %v248 = vsel %vm246, 1, 0
    %v249 = vsel %vm247, 1, 0
    %vm250 = vcmp.eq.s32.totalorder %v248, 1
    %vm251 = vcmp.eq.s32.totalorder %v249, 1
    %v252 = vsel %vm250, %v144, -1e+30
    %v253 = vsel %vm251, %v146, -1e+30
    %v254 = vsel %vm250, %v174, -1e+30
    %v255 = vsel %vm251, %v176, -1e+30
    %v256 = vsel %vm250, %v204, -1e+30
    %v257 = vsel %vm251, %v206, -1e+30
    %v258 = vsel %vm250, %v234, -1e+30
    %v259 = vsel %vm251, %v236, -1e+30
    %v260 = vld [vmem:[#allocation2] sm:$0xff]
    %v261 = vld [vmem:[#allocation2 + $0x8] sm:$0xff]
    %v262 = vld [vmem:[#allocation2 + $0x10] sm:$0xff]
    %v263 = vld [vmem:[#allocation2 + $0x18] sm:$0xff]
    %v264 = vld [vmem:[#allocation2 + $0x20] sm:$0xff]
    %v265 = vld [vmem:[#allocation2 + $0x28] sm:$0xff]
    %v266 = vld [vmem:[#allocation2 + $0x30] sm:$0xff]
    %v267 = vld [vmem:[#allocation2 + $0x38] sm:$0xff]
    %vm268 = vcmask 130048
    %v269 = vsel %vm268, %v252, -inf
    %270 = vmax.xlane.f32.xlu0 %v269
    %v271 = vpop.xlane.xlu0 %270
    %v272 = vsel %vm268, %v253, -inf
    %273 = vmax.xlane.f32.xlu0 %v272
    %v274 = vpop.xlane.xlu0 %273
    %v275 = vsel %vm268, %v254, -inf
    %276 = vmax.xlane.f32.xlu0 %v275
    %v277 = vpop.xlane.xlu0 %276
    %v278 = vsel %vm268, %v255, -inf
    %279 = vmax.xlane.f32.xlu0 %v278
    %v280 = vpop.xlane.xlu0 %279
    %v281 = vsel %vm268, %v256, -inf
    %282 = vmax.xlane.f32.xlu0 %v281
    %v283 = vpop.xlane.xlu0 %282
    %v284 = vsel %vm268, %v257, -inf
    %285 = vmax.xlane.f32.xlu0 %v284
    %v286 = vpop.xlane.xlu0 %285
    %v287 = vsel %vm268, %v258, -inf
    %288 = vmax.xlane.f32.xlu0 %v287
    %v289 = vpop.xlane.xlu0 %288
    %v290 = vsel %vm268, %v259, -inf
    %291 = vmax.xlane.f32.xlu0 %v290
    %v292 = vpop.xlane.xlu0 %291
    %v293 = vmax.f32 %v260, %v271
    %v294 = vmax.f32 %v261, %v274
    %v295 = vmax.f32 %v262, %v277
    %v296 = vmax.f32 %v263, %v280
    %v297 = vmax.f32 %v264, %v283
    %v298 = vmax.f32 %v265, %v286
    %v299 = vmax.f32 %v266, %v289
    %v300 = vmax.f32 %v267, %v292
    %v301 = vsub.f32 %v260, %v293
    %v302 = vsub.f32 %v261, %v294
    %v303 = vsub.f32 %v262, %v295
    %v304 = vsub.f32 %v263, %v296
    %v305 = vsub.f32 %v264, %v297
    %v306 = vsub.f32 %v265, %v298
    %v307 = vsub.f32 %v266, %v299
    %v308 = vsub.f32 %v267, %v300
    %v309 = vmul.f32 %v301, 1.442695
    %v310 = vpow.pop %v309
    %v311 = vmul.f32 %v302, 1.442695
    %v312 = vpow.pop %v311
    %v313 = vmul.f32 %v303, 1.442695
    %v314 = vpow.pop %v313
    %v315 = vmul.f32 %v304, 1.442695
    %v316 = vpow.pop %v315
    %v317 = vmul.f32 %v305, 1.442695
    %v318 = vpow.pop %v317
    %v319 = vmul.f32 %v306, 1.442695
    %v320 = vpow.pop %v319
    %v321 = vmul.f32 %v307, 1.442695
    %v322 = vpow.pop %v321
    %v323 = vmul.f32 %v308, 1.442695
    %v324 = vpow.pop %v323
    %326 = vset.pattern.permute.xlu0 0
    %327 = vperm.xlu0 %326, %v293
    %v328 = vpop.permute.xlu0 %327
    %331 = vset.pattern.permute.xlu0 0
    %332 = vperm.xlu0 %331, %v294
    %v333 = vpop.permute.xlu0 %332
    %336 = vset.pattern.permute.xlu0 0
    %337 = vperm.xlu0 %336, %v295
    %v338 = vpop.permute.xlu0 %337
    %341 = vset.pattern.permute.xlu0 0
    %342 = vperm.xlu0 %341, %v296
    %v343 = vpop.permute.xlu0 %342
    %346 = vset.pattern.permute.xlu0 0
    %347 = vperm.xlu0 %346, %v297
    %v348 = vpop.permute.xlu0 %347
    %351 = vset.pattern.permute.xlu0 0
    %352 = vperm.xlu0 %351, %v298
    %v353 = vpop.permute.xlu0 %352
    %356 = vset.pattern.permute.xlu0 0
    %357 = vperm.xlu0 %356, %v299
    %v358 = vpop.permute.xlu0 %357
    %361 = vset.pattern.permute.xlu0 0
    %362 = vperm.xlu0 %361, %v300
    %v363 = vpop.permute.xlu0 %362
    %v365 = vsub.f32 %v252, %v328
    %v366 = vsub.f32 %v253, %v333
    %v367 = vsub.f32 %v254, %v338
    %v368 = vsub.f32 %v255, %v343
    %v369 = vsub.f32 %v256, %v348
    %v370 = vsub.f32 %v257, %v353
    %v371 = vsub.f32 %v258, %v358
    %v372 = vsub.f32 %v259, %v363
    %v373 = vmul.f32 %v365, 1.442695
    %v374 = vpow.pop %v373
    %v375 = vmul.f32 %v366, 1.442695
    %v376 = vpow.pop %v375
    %v377 = vmul.f32 %v367, 1.442695
    %v378 = vpow.pop %v377
    %v379 = vmul.f32 %v368, 1.442695
    %v380 = vpow.pop %v379
    %v381 = vmul.f32 %v369, 1.442695
    %v382 = vpow.pop %v381
    %v383 = vmul.f32 %v370, 1.442695
    %v384 = vpow.pop %v383
    %v385 = vmul.f32 %v371, 1.442695
    %v386 = vpow.pop %v385
    %v387 = vmul.f32 %v372, 1.442695
    %v388 = vpow.pop %v387
    %v389 = vld [vmem:[#allocation3] sm:$0xff]
    %v390 = vld [vmem:[#allocation3 + $0x8] sm:$0xff]
    %v391 = vld [vmem:[#allocation3 + $0x10] sm:$0xff]
    %v392 = vld [vmem:[#allocation3 + $0x18] sm:$0xff]
    %v393 = vld [vmem:[#allocation3 + $0x20] sm:$0xff]
    %v394 = vld [vmem:[#allocation3 + $0x28] sm:$0xff]
    %v395 = vld [vmem:[#allocation3 + $0x30] sm:$0xff]
    %v396 = vld [vmem:[#allocation3 + $0x38] sm:$0xff]
    %v397 = vmul.f32 %v310, %v389
    %v398 = vmul.f32 %v312, %v390
    %v399 = vmul.f32 %v314, %v391
    %v400 = vmul.f32 %v316, %v392
    %v401 = vmul.f32 %v318, %v393
    %v402 = vmul.f32 %v320, %v394
    %v403 = vmul.f32 %v322, %v395
    %v404 = vmul.f32 %v324, %v396
    %v405 = vsel %vm268, %v374, 0.0
    %406 = vadd.xlane.f32.xlu0 %v405
    %v407 = vpop.xlane.xlu0 %406
    %v408 = vsel %vm268, %v376, 0.0
    %409 = vadd.xlane.f32.xlu0 %v408
    %v410 = vpop.xlane.xlu0 %409
    %v411 = vsel %vm268, %v378, 0.0
    %412 = vadd.xlane.f32.xlu0 %v411
    %v413 = vpop.xlane.xlu0 %412
    %v414 = vsel %vm268, %v380, 0.0
    %415 = vadd.xlane.f32.xlu0 %v414
    %v416 = vpop.xlane.xlu0 %415
    %v417 = vsel %vm268, %v382, 0.0
    %418 = vadd.xlane.f32.xlu0 %v417
    %v419 = vpop.xlane.xlu0 %418
    %v420 = vsel %vm268, %v384, 0.0
    %421 = vadd.xlane.f32.xlu0 %v420
    %v422 = vpop.xlane.xlu0 %421
    %v423 = vsel %vm268, %v386, 0.0
    %424 = vadd.xlane.f32.xlu0 %v423
    %v425 = vpop.xlane.xlu0 %424
    %v426 = vsel %vm268, %v388, 0.0
    %427 = vadd.xlane.f32.xlu0 %v426
    %v428 = vpop.xlane.xlu0 %427
    %v429 = vadd.f32 %v397, %v407
    %v430 = vadd.f32 %v398, %v410
    %v431 = vadd.f32 %v399, %v413
    %v432 = vadd.f32 %v400, %v416
    %v433 = vadd.f32 %v401, %v419
    %v434 = vadd.f32 %v402, %v422
    %v435 = vadd.f32 %v403, %v425
    %v436 = vadd.f32 %v404, %v428
    %vm437 = vcmask 7168
    %438 = vst.msk [vmem:[#allocation3] sm:$0xff] %vm437, %v429
    %439 = vst.msk [vmem:[#allocation3 + $0x8] sm:$0xff] %vm437, %v430
    %440 = vst.msk [vmem:[#allocation3 + $0x10] sm:$0xff] %vm437, %v431
    %441 = vst.msk [vmem:[#allocation3 + $0x18] sm:$0xff] %vm437, %v432
    %442 = vst.msk [vmem:[#allocation3 + $0x20] sm:$0xff] %vm437, %v433
    %443 = vst.msk [vmem:[#allocation3 + $0x28] sm:$0xff] %vm437, %v434
    %444 = vst.msk [vmem:[#allocation3 + $0x30] sm:$0xff] %vm437, %v435
    %445 = vst.msk [vmem:[#allocation3 + $0x38] sm:$0xff] %vm437, %v436
    %v446 = vld [vmem:[#allocation4] sm:$0xff]
    %v447 = vld [vmem:[#allocation4 + $0x8] sm:$0xff]
    %v448 = vld [vmem:[#allocation4 + $0x10] sm:$0xff]
    %v449 = vld [vmem:[#allocation4 + $0x18] sm:$0xff]
    %v450 = vld [vmem:[#allocation4 + $0x20] sm:$0xff]
    %v451 = vld [vmem:[#allocation4 + $0x28] sm:$0xff]
    %v452 = vld [vmem:[#allocation4 + $0x30] sm:$0xff]
    %v453 = vld [vmem:[#allocation4 + $0x38] sm:$0xff]
    %455 = vset.pattern.permute.xlu0 0
    %456 = vperm.xlu0 %455, %v310
    %v457 = vpop.permute.xlu0 %456
    %460 = vset.pattern.permute.xlu0 0
    %461 = vperm.xlu0 %460, %v312
    %v462 = vpop.permute.xlu0 %461
    %465 = vset.pattern.permute.xlu0 0
    %466 = vperm.xlu0 %465, %v314
    %v467 = vpop.permute.xlu0 %466
    %470 = vset.pattern.permute.xlu0 0
    %471 = vperm.xlu0 %470, %v316
    %v472 = vpop.permute.xlu0 %471
    %475 = vset.pattern.permute.xlu0 0
    %476 = vperm.xlu0 %475, %v318
    %v477 = vpop.permute.xlu0 %476
    %480 = vset.pattern.permute.xlu0 0
    %481 = vperm.xlu0 %480, %v320
    %v482 = vpop.permute.xlu0 %481
    %485 = vset.pattern.permute.xlu0 0
    %486 = vperm.xlu0 %485, %v322
    %v487 = vpop.permute.xlu0 %486
    %490 = vset.pattern.permute.xlu0 0
    %491 = vperm.xlu0 %490, %v324
    %v492 = vpop.permute.xlu0 %491
    %v494 = vmul.f32 %v457, %v446
    %v495 = vmul.f32 %v462, %v447
    %v496 = vmul.f32 %v467, %v448
    %v497 = vmul.f32 %v472, %v449
    %v498 = vmul.f32 %v477, %v450
    %v499 = vmul.f32 %v482, %v451
    %v500 = vmul.f32 %v487, %v452
    %v501 = vmul.f32 %v492, %v453
    %v502 = vpack.c.bf16 %v374, %v374
    %v503 = vpack.c.bf16 %v376, %v376
    %v504 = vpack.c.bf16 %v378, %v378
    %v505 = vpack.c.bf16 %v380, %v380
    %v506 = vpack.c.bf16 %v382, %v382
    %v507 = vpack.c.bf16 %v384, %v384
    %v508 = vpack.c.bf16 %v386, %v386
    %v509 = vpack.c.bf16 %v388, %v388
    %v512 = vunpack.c.l.b16 %v502
    %v513 = vunpack.c.l.b16 %v503
    %v514 = vpack.c.b16 %v513, %v512
    %v517 = vunpack.c.l.b16 %v101
    %v518 = vunpack.c.l.b16 %v102
    %v519 = vpack.c.b16 %v518, %v517
    %v522 = vsel %vm268, %v514, 0
    %524 = vmatpush.bf16.msra.mxu0 0
    %525 = vmatpush.bf16.msra.mxu0 0
    %526 = vmatpush.bf16.msra.mxu0 0
    %527 = vmatpush.bf16.msra.mxu0 0
    %528 = vmatpush.bf16.msra.mxu0 0
    %529 = vmatpush.bf16.msra.mxu0 0
    %530 = vmatpush.bf16.msra.mxu0 0
    %531 = vmatpush.bf16.msra.mxu0 %v519
    %532 = vmatmul.bf16.gmra.mxu0 %v522
    %v533 = vpop.f32.mrf.mxu0
    %v534 = vadd.f32 0.0, %v533
    %v535 = vpop.f32.mrf.mxu0
    %v536 = vadd.f32 0.0, %v535
    %537 = vdwg.mxu0
    %v540 = vunpack.c.l.b16 %v504
    %v541 = vunpack.c.l.b16 %v505
    %v542 = vpack.c.b16 %v541, %v540
    %v545 = vunpack.c.l.b16 %v103
    %v546 = vunpack.c.l.b16 %v104
    %v547 = vpack.c.b16 %v546, %v545
    %v550 = vsel %vm268, %v542, 0
    %552 = vmatpush.bf16.msra.mxu0 0
    %553 = vmatpush.bf16.msra.mxu0 0
    %554 = vmatpush.bf16.msra.mxu0 0
    %555 = vmatpush.bf16.msra.mxu0 0
    %556 = vmatpush.bf16.msra.mxu0 0
    %557 = vmatpush.bf16.msra.mxu0 0
    %558 = vmatpush.bf16.msra.mxu0 0
    %559 = vmatpush.bf16.msra.mxu0 %v547
    %560 = vmatmul.bf16.gmra.mxu0 %v550
    %v561 = vpop.f32.mrf.mxu0
    %v562 = vadd.f32 0.0, %v561
    %v563 = vpop.f32.mrf.mxu0
    %v564 = vadd.f32 0.0, %v563
    %565 = vdwg.mxu0
    %v568 = vunpack.c.l.b16 %v506
    %v569 = vunpack.c.l.b16 %v507
    %v570 = vpack.c.b16 %v569, %v568
    %v573 = vunpack.c.l.b16 %v105
    %v574 = vunpack.c.l.b16 %v106
    %v575 = vpack.c.b16 %v574, %v573
    %v578 = vsel %vm268, %v570, 0
    %580 = vmatpush.bf16.msra.mxu0 0
    %581 = vmatpush.bf16.msra.mxu0 0
    %582 = vmatpush.bf16.msra.mxu0 0
    %583 = vmatpush.bf16.msra.mxu0 0
    %584 = vmatpush.bf16.msra.mxu0 0
    %585 = vmatpush.bf16.msra.mxu0 0
    %586 = vmatpush.bf16.msra.mxu0 0
    %587 = vmatpush.bf16.msra.mxu0 %v575
    %588 = vmatmul.bf16.gmra.mxu0 %v578
    %v589 = vpop.f32.mrf.mxu0
    %v590 = vadd.f32 0.0, %v589
    %v591 = vpop.f32.mrf.mxu0
    %v592 = vadd.f32 0.0, %v591
    %593 = vdwg.mxu0
    %v596 = vunpack.c.l.b16 %v508
    %v597 = vunpack.c.l.b16 %v509
    %v598 = vpack.c.b16 %v597, %v596
    %v601 = vunpack.c.l.b16 %v107
    %v602 = vunpack.c.l.b16 %v108
    %v603 = vpack.c.b16 %v602, %v601
    %v606 = vsel %vm268, %v598, 0
    %608 = vmatpush.bf16.msra.mxu0 0
    %609 = vmatpush.bf16.msra.mxu0 0
    %610 = vmatpush.bf16.msra.mxu0 0
    %611 = vmatpush.bf16.msra.mxu0 0
    %612 = vmatpush.bf16.msra.mxu0 0
    %613 = vmatpush.bf16.msra.mxu0 0
    %614 = vmatpush.bf16.msra.mxu0 0
    %615 = vmatpush.bf16.msra.mxu0 %v603
    %616 = vmatmul.bf16.gmra.mxu0 %v606
    %v617 = vpop.f32.mrf.mxu0
    %v618 = vadd.f32 0.0, %v617
    %v619 = vpop.f32.mrf.mxu0
    %v620 = vadd.f32 0.0, %v619
    %621 = vdwg.mxu0
    %v622 = vadd.f32 %v494, %v534
    %v623 = vadd.f32 %v495, %v536
    %v624 = vadd.f32 %v496, %v562
    %v625 = vadd.f32 %v497, %v564
    %v626 = vadd.f32 %v498, %v590
    %v627 = vadd.f32 %v499, %v592
    %v628 = vadd.f32 %v500, %v618
    %v629 = vadd.f32 %v501, %v620
    %630 = vst.msk [vmem:[#allocation4] sm:$0xff] %vm127, %v622
    %631 = vst.msk [vmem:[#allocation4 + $0x8] sm:$0xff] %vm127, %v623
    %632 = vst.msk [vmem:[#allocation4 + $0x10] sm:$0xff] %vm127, %v624
    %633 = vst.msk [vmem:[#allocation4 + $0x18] sm:$0xff] %vm127, %v625
    %634 = vst.msk [vmem:[#allocation4 + $0x20] sm:$0xff] %vm127, %v626
    %635 = vst.msk [vmem:[#allocation4 + $0x28] sm:$0xff] %vm127, %v627
    %636 = vst.msk [vmem:[#allocation4 + $0x30] sm:$0xff] %vm127, %v628
    %637 = vst.msk [vmem:[#allocation4 + $0x38] sm:$0xff] %vm127, %v629
    %638 = vst.msk [vmem:[#allocation2] sm:$0xff] %vm437, %v293
    %639 = vst.msk [vmem:[#allocation2 + $0x8] sm:$0xff] %vm437, %v294
    %640 = vst.msk [vmem:[#allocation2 + $0x10] sm:$0xff] %vm437, %v295
    %641 = vst.msk [vmem:[#allocation2 + $0x18] sm:$0xff] %vm437, %v296
    %642 = vst.msk [vmem:[#allocation2 + $0x20] sm:$0xff] %vm437, %v297
    %643 = vst.msk [vmem:[#allocation2 + $0x28] sm:$0xff] %vm437, %v298
    %644 = vst.msk [vmem:[#allocation2 + $0x30] sm:$0xff] %vm437, %v299
    %645 = vst.msk [vmem:[#allocation2 + $0x38] sm:$0xff] %vm437, %v300
  $region29: #{graph_transformer_forward.6} parent=0 // pred_fallthru
    _
  // Predicated region
  $region30: #{graph_transformer_forward.6} parent=0 // pred_check
    %p646 = pneg %p49
  $region31: #{graph_transformer_forward.6} parent=0 // pred_check_branch
    %648 = sbr.rel (%p646) target = $region33
  $region32: #{graph_transformer_forward.6} parent=0 // pred_region
    %v649 = vld [vmem:[#allocation3] sm:$0xff]
    %v650 = vld [vmem:[#allocation3 + $0x8] sm:$0xff]
    %v651 = vld [vmem:[#allocation3 + $0x10] sm:$0xff]
    %v652 = vld [vmem:[#allocation3 + $0x18] sm:$0xff]
    %v653 = vld [vmem:[#allocation3 + $0x20] sm:$0xff]
    %v654 = vld [vmem:[#allocation3 + $0x28] sm:$0xff]
    %v655 = vld [vmem:[#allocation3 + $0x30] sm:$0xff]
    %v656 = vld [vmem:[#allocation3 + $0x38] sm:$0xff]
    %vm657 = vcmp.gt.f32.partialorder %v649, 0.0
    %vm658 = vcmp.gt.f32.partialorder %v650, 0.0
    %vm659 = vcmp.gt.f32.partialorder %v651, 0.0
    %vm660 = vcmp.gt.f32.partialorder %v652, 0.0
    %vm661 = vcmp.gt.f32.partialorder %v653, 0.0
    %vm662 = vcmp.gt.f32.partialorder %v654, 0.0
    %vm663 = vcmp.gt.f32.partialorder %v655, 0.0
    %vm664 = vcmp.gt.f32.partialorder %v656, 0.0
    %v665 = vsel %vm657, %v649, 1.0
    %v666 = vsel %vm658, %v650, 1.0
    %v667 = vsel %vm659, %v651, 1.0
    %v668 = vsel %vm660, %v652, 1.0
    %v669 = vsel %vm661, %v653, 1.0
    %v670 = vsel %vm662, %v654, 1.0
    %v671 = vsel %vm663, %v655, 1.0
    %v672 = vsel %vm664, %v656, 1.0
    %v673 = vrcp.pop %v665
    %v674 = vrcp.pop %v666
    %v675 = vrcp.pop %v667
    %v676 = vrcp.pop %v668
    %v677 = vrcp.pop %v669
    %v678 = vrcp.pop %v670
    %v679 = vrcp.pop %v671
    %v680 = vrcp.pop %v672
    %v681 = vld [vmem:[#allocation4] sm:$0xff]
    %v682 = vld [vmem:[#allocation4 + $0x8] sm:$0xff]
    %v683 = vld [vmem:[#allocation4 + $0x10] sm:$0xff]
    %v684 = vld [vmem:[#allocation4 + $0x18] sm:$0xff]
    %v685 = vld [vmem:[#allocation4 + $0x20] sm:$0xff]
    %v686 = vld [vmem:[#allocation4 + $0x28] sm:$0xff]
    %v687 = vld [vmem:[#allocation4 + $0x30] sm:$0xff]
    %v688 = vld [vmem:[#allocation4 + $0x38] sm:$0xff]
    %690 = vset.pattern.permute.xlu0 0
    %691 = vperm.xlu0 %690, %v673
    %v692 = vpop.permute.xlu0 %691
    %695 = vset.pattern.permute.xlu0 0
    %696 = vperm.xlu0 %695, %v674
    %v697 = vpop.permute.xlu0 %696
    %700 = vset.pattern.permute.xlu0 0
    %701 = vperm.xlu0 %700, %v675
    %v702 = vpop.permute.xlu0 %701
    %705 = vset.pattern.permute.xlu0 0
    %706 = vperm.xlu0 %705, %v676
    %v707 = vpop.permute.xlu0 %706
    %710 = vset.pattern.permute.xlu0 0
    %711 = vperm.xlu0 %710, %v677
    %v712 = vpop.permute.xlu0 %711
    %715 = vset.pattern.permute.xlu0 0
    %716 = vperm.xlu0 %715, %v678
    %v717 = vpop.permute.xlu0 %716
    %720 = vset.pattern.permute.xlu0 0
    %721 = vperm.xlu0 %720, %v679
    %v722 = vpop.permute.xlu0 %721
    %725 = vset.pattern.permute.xlu0 0
    %726 = vperm.xlu0 %725, %v680
    %v727 = vpop.permute.xlu0 %726
    %v729 = vmul.f32 %v681, %v692
    %v730 = vmul.f32 %v682, %v697
    %v731 = vmul.f32 %v683, %v702
    %v732 = vmul.f32 %v684, %v707
    %v733 = vmul.f32 %v685, %v712
    %v734 = vmul.f32 %v686, %v717
    %v735 = vmul.f32 %v687, %v722
    %v736 = vmul.f32 %v688, %v727
    %739 = vrot.lane.b32.xlu0 %v731, 8
    %v740 = vpop.permute.xlu0 %739
    %741 = vrot.lane.b32.xlu0 %v732, 8
    %v742 = vpop.permute.xlu0 %741
    %747 = vrot.lane.b32.xlu0 %v733, 16
    %v748 = vpop.permute.xlu0 %747
    %749 = vrot.lane.b32.xlu0 %v734, 16
    %v750 = vpop.permute.xlu0 %749
    %755 = vrot.lane.b32.xlu0 %v735, 24
    %v756 = vpop.permute.xlu0 %755
    %757 = vrot.lane.b32.xlu0 %v736, 24
    %v758 = vpop.permute.xlu0 %757
    %vm761 = vcmask 64512
    %v762 = vsel %vm761, %v729, %v740
    %v763 = vsel %vm761, %v730, %v742
    %vm764 = vcmask 130048
    %v765 = vsel %vm764, %v762, %v748
    %v766 = vsel %vm764, %v763, %v750
    %vm767 = vcmask 195584
    %v768 = vsel %vm767, %v765, %v756
    %v769 = vsel %vm767, %v766, %v758
    %v770 = vld [vmem:[%s6] sm:$0xf]
    %v771 = vld [vmem:[%s6 + $0x4] sm:$0xf]
    %v772 = vunpack.c.l.bf16 %v770
    %v773 = vunpack.c.l.bf16 %v771
    %v774 = vadd.f32 %v768, %v772
    %v775 = vadd.f32 %v769, %v773
    %v776 = vmax.f32 %v774, 0.0
    %v777 = vmax.f32 %v775, 0.0
    %v778 = vpack.c.bf16 %v776, %v776
    %v779 = vpack.c.bf16 %v777, %v777
    %vm780 = vcmask 257024
    %781 = vst.msk [vmem:[%s7] sm:$0xf] %vm780, %v778
    %782 = vst.msk [vmem:[%s7 + $0x4] sm:$0xf] %vm780, %v779
  $region33: #{graph_transformer_forward.6} parent=0 // pred_fallthru
    _
  // Predicated region
  $region34: #{graph_transformer_forward.6} parent=0 // pred_check
    _
  $region35: #{graph_transformer_forward.6} parent=0 // pred_check_branch
    %784 = sbr.rel (0) target = $region37
  $region36: #{graph_transformer_forward.6} parent=0 // pred_region
    _
  $region37: #{graph_transformer_forward.6} parent=0 // pred_fallthru
    _
  // Predicated region
  $region38: #{graph_transformer_forward.6} parent=0 // pred_check
    _
  $region39: #{graph_transformer_forward.6} parent=0 // pred_check_branch
    %786 = sbr.rel (0) target = $region41
  $region40: #{graph_transformer_forward.6} parent=0 // pred_region
    _
  $region41: #{graph_transformer_forward.6} parent=0 // pred_fallthru
    _

// kernel: graph_transformer_forward.9
$region0: #{graph_transformer_forward.9}
  #allocation0 [shape = 'u32[]', space=smem, size = 0x4, offset = 0x4, fixed_abs, tag = 'smem constant byte address 0x4 - core index']
  #allocation1 [shape = 'u32[72,128]{1,0:T(1,128)}', space=vmem, size = 0x9000, scoped, tag = 'internal scratch']
  %s0 = inlined_call_operand.vmem [shape: f32[2,16], index: 0, kind: input, shape index: {}]
  %s1 = inlined_call_operand.vmem [shape: bf16[16,32], index: 1, kind: input, shape index: {}]
  %s2 = inlined_call_operand.vmem [shape: f32[32,4], index: 2, kind: input, shape index: {}]
  %s3 = inlined_call_operand.vmem [shape: f32[1,4], index: 3, kind: input, shape index: {}]
  %s4 = inlined_call_operand.hbm [shape: f32[2,4], index: 4, kind: output, shape index: {}]
  %s5 = sld [smem:[#allocation0]]
  $region26: #{graph_transformer_forward.9} parent=0
    _
  %s7 = ssub.s32 1, %s5
  %s8 = scalar_select 0, %s7, %s5
  $region1: #{graph_transformer_forward.9} parent=0
    #allocation2 [shape = 'u8[1024]{0}', space=vmem, size = 0x400, scoped, tag = 'output window, operand 0, single buffered']
    #allocation3 [shape = 's32[1]{0}', space=sflag, size = 0x4, scoped, tag = 'scoped memory for graph_transformer_forward.9']
    %9 = vsyncpa [#allocation3], 0
    // Predicated region
    $region2: #{graph_transformer_forward.9} parent=1 // pred_check
      _
    $region3: #{graph_transformer_forward.9} parent=1 // pred_check_branch
      %11 = sbr.rel (0) target = $region5
    $region4: #{graph_transformer_forward.9} parent=1 // pred_region
      _
    $region5: #{graph_transformer_forward.9} parent=1 // pred_fallthru
      _
    // Predicated region
    $region6: #{graph_transformer_forward.9} parent=1 // pred_check
      _
    $region7: #{graph_transformer_forward.9} parent=1 // pred_check_branch
      %13 = sbr.rel (0) target = $region9
    $region8: #{graph_transformer_forward.9} parent=1 // pred_region
      _
    $region9: #{graph_transformer_forward.9} parent=1 // pred_fallthru
      _
    // Predicated region
    $region10: #{graph_transformer_forward.9} parent=1 // pred_check
      _
    $region11: #{graph_transformer_forward.9} parent=1 // pred_check_branch
      %15 = sbr.rel (0) target = $region13
    $region12: #{graph_transformer_forward.9} parent=1 // pred_region
      _
    $region13: #{graph_transformer_forward.9} parent=1 // pred_fallthru
      _
    // Predicated region
    $region14: #{graph_transformer_forward.9} parent=1 // pred_check
      _
    $region15: #{graph_transformer_forward.9} parent=1 // pred_check_branch
      %17 = sbr.rel (0) target = $region17
    $region16: #{graph_transformer_forward.9} parent=1 // pred_region
      _
    $region17: #{graph_transformer_forward.9} parent=1 // pred_fallthru
      _
    %v18 = vld [vmem:[%s0] sm:$0x3]
    %v19 = vld [vmem:[%s1] sm:$0xf]
    %v20 = vld [vmem:[%s1 + $0x4] sm:$0xf]
    %v21 = vunpack.c.l.bf16 %v19
    %v22 = vunpack.c.l.bf16 %v20
    %vm23 = vcmask 130048
    %v25 = vsel %vm23, %v18, 0
    %27 = vmatpush.msra.mxu0 0.0
    %28 = vmatpush.msra.mxu0 0.0
    %29 = vmatpush.msra.mxu0 0.0
    %30 = vmatpush.msra.mxu0 0.0
    %31 = vmatpush.msra.mxu0 0.0
    %32 = vmatpush.msra.mxu0 0.0
    %33 = vmatpush.msra.mxu0 0.0
    %34 = vmatpush.msra.mxu0 0.0
    %35 = vmatpush.msra.mxu0 0.0
    %36 = vmatpush.msra.mxu0 0.0
    %37 = vmatpush.msra.mxu0 0.0
    %38 = vmatpush.msra.mxu0 0.0
    %39 = vmatpush.msra.mxu0 0.0
    %40 = vmatpush.msra.mxu0 0.0
    %41 = vmatpush.msra.mxu0 %v22
    %42 = vmatpush.msra.mxu0 %v21
    %43 = vmatmul.f32.gmra.mxu0 %v25
    %v44 = vpop.f32.mrf.mxu0
    %v45 = vadd.f32 0.0, %v44
    %46 = vdwg.mxu0
    %v47 = vld [vmem:[%s2] sm:$0xff]
    %v48 = vld [vmem:[%s2 + $0x8] sm:$0xff]
    %v49 = vld [vmem:[%s2 + $0x10] sm:$0xff]
    %v50 = vld [vmem:[%s2 + $0x18] sm:$0xff]
    %v51 = vld [vmem:[%s3] sm:$0x1]
    %v53 = vperm.slane %v51, 0
    %vm55 = vcmask 261120
    %v57 = vsel %vm55, %v45, 0
    %59 = vmatpush.msra.mxu0 0.0
    %60 = vmatpush.msra.mxu0 0.0
    %61 = vmatpush.msra.mxu0 0.0
    %62 = vmatpush.msra.mxu0 0.0
    %63 = vmatpush.msra.mxu0 0.0
    %64 = vmatpush.msra.mxu0 0.0
    %65 = vmatpush.msra.mxu0 0.0
    %66 = vmatpush.msra.mxu0 0.0
    %67 = vmatpush.msra.mxu0 0.0
    %68 = vmatpush.msra.mxu0 0.0
    %69 = vmatpush.msra.mxu0 0.0
    %70 = vmatpush.msra.mxu0 0.0
    %71 = vmatpush.msra.mxu0 %v50
    %72 = vmatpush.msra.mxu0 %v49
    %73 = vmatpush.msra.mxu0 %v48
    %74 = vmatpush.msra.mxu0 %v47
    %75 = vmatmul.f32.gmra.mxu0 %v57
    %v76 = vpop.f32.mrf.mxu0
    %v77 = vadd.f32 %v53, %v76
    %78 = vdwg.mxu0
    %vm79 = vcmask 25600
    %80 = vst.msk [vmem:[#allocation2] sm:$0x3] %vm79, %v77
    // Predicated region
    $region18: #{graph_transformer_forward.9} parent=1 // pred_check
      _
    $region19: #{graph_transformer_forward.9} parent=1 // pred_check_branch
      %82 = sbr.rel (0) target = $region21
    $region20: #{graph_transformer_forward.9} parent=1 // pred_region
      %84 = vsyncadd [#allocation3], 0
      %s86 = sshll.u32 [#allocation2], 4
      %s87 = int_to_ptr.vmem [resolvable:$true] %s86
      %s88 = sshll.u32 %s4, 4
      %s89 = int_to_ptr.hbm [resolvable:$true] %s88
      %91 = dma.vmem_to_hbm [thread:$0]  %s87, 32, %s89, [#allocation3]
    $region21: #{graph_transformer_forward.9} parent=1 // pred_fallthru
      _
    // Predicated region
    $region22: #{graph_transformer_forward.9} parent=1 // pred_check
      _
    $region23: #{graph_transformer_forward.9} parent=1 // pred_check_branch
      %93 = sbr.rel (0) target = $region25
    $region24: #{graph_transformer_forward.9} parent=1 // pred_region
      %95 = dma.done [#allocation3], 32
    $region25: #{graph_transformer_forward.9} parent=1 // pred_fallthru
      _
    %96 = vsyncpa [#allocation3], 1

</llo_original>
